<compile_context>
chip_gen: v7x
topology: tpu7x:2x2x1
jax: 0.10.0
libtpu: 0.0.40
codegen_flags: <defaults>
</compile_context>

<pallas_src>
import functools

import jax
import jax.numpy as jnp
from jax.experimental import pallas as pl
from jax.experimental.pallas import tpu as pltpu

IN_FEATURES = 6
HIDDEN = 16
NEG_SLOPE = 0.01  # PyTorch LeakyReLU default


def _lrelu(z):
    # max(z, a*z) == LeakyReLU(z) for 0 < a < 1 (2 VALU vreg-ops vs 3 for where()).
    return jnp.maximum(z, NEG_SLOPE * z)


def _round_up(n, m):
    return ((n + m - 1) // m) * m


def mnn_kernel(x_ref,
               w1_ref, b1_ref,
               w2_ref, b2_ref,
               w3_ref, b3_ref,
               w4_ref, b4_ref,
               w5_ref, b5_ref,
               w6_ref, b6_ref,
               o_ref):
    # x_ref : (T, 6) row-major batch tile.
    # w1_ref: (16, 6) -- already divided by 50 (input scale folded in).
    # w2..w5: (16, 16); biases b1..b5: (16, 1).
    # w6_ref: (16, 1) -- already multiplied by 50; b6_ref: (1, 1) -- x50 folded in.
    # o_ref : (1, T)  lane-dense output tile.

    # Layer 1 as a transposed-RHS matmul: (16,6) x (T,6)^T -> (16, T).
    # Fuses the row-major -> feature-major transpose into the (idle) MXU and puts the
    # batch on the lane axis for the rest of the network.
    h = jax.lax.dot_general(
        w1_ref[...], x_ref[...],
        dimension_numbers=(((1,), (1,)), ((), ())),
        preferred_element_type=jnp.float32) + b1_ref[...]
    h = _lrelu(h)                                                        # (16, T)

    # layer2 / layer3: x = x + lrelu(W x + b) * x
    g = _lrelu(jnp.dot(w2_ref[...], h,
                       preferred_element_type=jnp.float32) + b2_ref[...])
    h = h + g * h
    g = _lrelu(jnp.dot(w3_ref[...], h,
                       preferred_element_type=jnp.float32) + b3_ref[...])
    h = h + g * h

    # decoder MLP
    d = _lrelu(jnp.dot(w4_ref[...], h,
                       preferred_element_type=jnp.float32) + b4_ref[...])
    d = _lrelu(jnp.dot(w5_ref[...], d,
                       preferred_element_type=jnp.float32) + b5_ref[...])

    # Final 16 -> 1 projection: VPU multiply + sublane (XLU) reduce.
    # Result is the lane-dense (1, T) row; x50 already folded into w6/b6.
    y = jnp.sum(d * w6_ref[...], axis=0, keepdims=True) + b6_ref[...]    # (1, T)
    o_ref[...] = y.astype(o_ref.dtype)


@functools.partial(jax.jit, static_argnames=("target_tile",))
def mnn_forward(x, kernel_params, target_tile=16384):
    """x: (B, 6) float32 -> (B, 1) float32 (matches the PyTorch module)."""
    (w1, b1, w2, b2, w3, b3, w4, b4, w5, b5, w6, b6) = kernel_params

    B, F = x.shape
    assert F == IN_FEATURES

    if B >= 512:
        # Large tile to amortize the ~0.35us/step fixed cost; at least 2 balanced
        # steps when possible (v7x has 2 TensorCores).  tile_b <= B always holds here.
        tile_b = max(512, min(target_tile, _round_up(pl.cdiv(B, 2), 512)))
    else:
        # Tiny batch: single full-array block (block dims == array dims is always legal).
        tile_b = B
    num_tiles = pl.cdiv(B, tile_b)

    def wspec(shape):
        return pl.BlockSpec(shape, lambda i: (0, 0))   # VMEM-resident, fetched once

    out = pl.pallas_call(
        mnn_kernel,
        out_shape=jax.ShapeDtypeStruct((1, B), jnp.float32),
        grid_spec=pltpu.PrefetchScalarGridSpec(
            num_scalar_prefetch=0,
            grid=(num_tiles,),
            in_specs=[
                pl.BlockSpec((tile_b, IN_FEATURES), lambda i: (i, 0)),   # x tile
                wspec((HIDDEN, IN_FEATURES)), wspec((HIDDEN, 1)),        # w1, b1
                wspec((HIDDEN, HIDDEN)),      wspec((HIDDEN, 1)),        # w2, b2
                wspec((HIDDEN, HIDDEN)),      wspec((HIDDEN, 1)),        # w3, b3
                wspec((HIDDEN, HIDDEN)),      wspec((HIDDEN, 1)),        # w4, b4
                wspec((HIDDEN, HIDDEN)),      wspec((HIDDEN, 1)),        # w5, b5
                wspec((HIDDEN, 1)),           wspec((1, 1)),             # w6, b6
            ],
            out_specs=pl.BlockSpec((1, tile_b), lambda i: (0, i)),
        ),
        compiler_params=pltpu.CompilerParams(
            dimension_semantics=("parallel",),
            vmem_limit_bytes=32 * 1024 * 1024),
    )(x, w1, b1, w2, b2, w3, b3, w4, b4, w5, b5, w6, b6)

    # (1, B) -> (B, 1): row-major layout-preserving reshape (no real data movement).
    return out.reshape(B, 1)


def init_params(key):
    """PyTorch-style Linear init; raw layout: w (out_features, in_features), b (out,)."""
    ks = jax.random.split(key, 12)
    it = iter(ks)

    def linear(fan_in, fan_out):
        bound = 1.0 / (fan_in ** 0.5)
        w = jax.random.uniform(next(it), (fan_out, fan_in), jnp.float32, -bound, bound)
        b = jax.random.uniform(next(it), (fan_out,), jnp.float32, -bound, bound)
        return w, b

    return (linear(IN_FEATURES, HIDDEN),   # layer1
            linear(HIDDEN, HIDDEN),        # layer2
            linear(HIDDEN, HIDDEN),        # layer3
            linear(HIDDEN, HIDDEN),        # dec[0]
            linear(HIDDEN, HIDDEN),        # dec[2]
            linear(HIDDEN, 1))             # dec[4]


def prepare_kernel_params(raw_params):
    """Fold the /50 input scale into w1 and the *50 output scale into w6/b6; reshape
    biases to (out, 1) columns so the kernel needs no per-layer broadcasts."""
    (w1, b1), (w2, b2), (w3, b3), (w4, b4), (w5, b5), (w6, b6) = raw_params
    col = lambda b: b.reshape(-1, 1)
    return (w1 * (1.0 / 50.0), col(b1),
            w2, col(b2),
            w3, col(b3),
            w4, col(b4),
            w5, col(b5),
            (w6 * 50.0).reshape(1, HIDDEN).T,   # (1,16) -> (16,1) column, x50 folded
            (b6 * 50.0).reshape(1, 1))


def reference_forward(x, raw_params):
    """Pure-JAX reference matching the PyTorch forward (high-precision matmuls)."""
    (w1, b1), (w2, b2), (w3, b3), (w4, b4), (w5, b5), (w6, b6) = raw_params
    dot = lambda a, b: jnp.dot(a, b, precision=jax.lax.Precision.HIGHEST)
    h = x / 50.0
    h = _lrelu(dot(h, w1.T) + b1)
    h = h + _lrelu(dot(h, w2.T) + b2) * h
    h = h + _lrelu(dot(h, w3.T) + b3) * h
    d = _lrelu(dot(h, w4.T) + b4)
    d = _lrelu(dot(d, w5.T) + b5)
    y = dot(d, w6.T) + b6                      # (B, 1)
    return y * 50.0


if __name__ == "__main__":
    key = jax.random.PRNGKey(0)
    k_param, k_x = jax.random.split(key)
    raw_params = init_params(k_param)
    kparams = prepare_kernel_params(raw_params)

    # batch=600: 2 grid steps with a partially-OOB tail block (no explicit padding).
    # batch=37 : single full-array block path for tiny batches.
    for batch in (600, 37):
        kx = jax.random.fold_in(k_x, batch)
        x = jax.random.normal(kx, (batch, IN_FEATURES), jnp.float32) * 20.0

        out = mnn_forward(x, kparams)
        jax.block_until_ready(out)

        ref = reference_forward(x, raw_params)
        assert out.shape == (batch, 1), out.shape
        max_err = jnp.max(jnp.abs(out - ref))
        assert jnp.allclose(out, ref, atol=2e-2, rtol=2e-2), (
            f"mismatch vs reference at batch={batch}: max abs err = {max_err}")

    print("KERNEL_OK")
</pallas_src>

<mosaic_0001>
module attributes {stable_mosaic.version = 11 : i64} {
  func.func @mnn_kernel(%arg0: i32, %arg1: memref<512x6xf32, #tpu.memory_space<vmem>>, %arg2: memref<16x6xf32, #tpu.memory_space<vmem>>, %arg3: memref<16x1xf32, #tpu.memory_space<vmem>>, %arg4: memref<16x16xf32, #tpu.memory_space<vmem>>, %arg5: memref<16x1xf32, #tpu.memory_space<vmem>>, %arg6: memref<16x16xf32, #tpu.memory_space<vmem>>, %arg7: memref<16x1xf32, #tpu.memory_space<vmem>>, %arg8: memref<16x16xf32, #tpu.memory_space<vmem>>, %arg9: memref<16x1xf32, #tpu.memory_space<vmem>>, %arg10: memref<16x16xf32, #tpu.memory_space<vmem>>, %arg11: memref<16x1xf32, #tpu.memory_space<vmem>>, %arg12: memref<16x1xf32, #tpu.memory_space<vmem>>, %arg13: memref<1x1xf32, #tpu.memory_space<vmem>>, %arg14: memref<1x512xf32, #tpu.memory_space<vmem>>) attributes {dimension_semantics = [#tpu.dimension_semantics<parallel>], iteration_bounds = array<i64: 2>, scalar_prefetch = 0 : i64, scratch_operands = 0 : i64, tpu.core_type = #tpu.core_type<tc>, window_params = [{transform_indices = @transform_0, window_bounds = array<i64: 512, 6>}, {pipeline_mode = #tpu.pipeline_mode<synchronous>, transform_indices = @transform_1, window_bounds = array<i64: 16, 6>}, {pipeline_mode = #tpu.pipeline_mode<synchronous>, transform_indices = @transform_2, window_bounds = array<i64: 16, 1>}, {pipeline_mode = #tpu.pipeline_mode<synchronous>, transform_indices = @transform_3, window_bounds = array<i64: 16, 16>}, {pipeline_mode = #tpu.pipeline_mode<synchronous>, transform_indices = @transform_4, window_bounds = array<i64: 16, 1>}, {pipeline_mode = #tpu.pipeline_mode<synchronous>, transform_indices = @transform_5, window_bounds = array<i64: 16, 16>}, {pipeline_mode = #tpu.pipeline_mode<synchronous>, transform_indices = @transform_6, window_bounds = array<i64: 16, 1>}, {pipeline_mode = #tpu.pipeline_mode<synchronous>, transform_indices = @transform_7, window_bounds = array<i64: 16, 16>}, {pipeline_mode = #tpu.pipeline_mode<synchronous>, transform_indices = @transform_8, window_bounds = array<i64: 16, 1>}, {pipeline_mode = #tpu.pipeline_mode<synchronous>, transform_indices = @transform_9, window_bounds = array<i64: 16, 16>}, {pipeline_mode = #tpu.pipeline_mode<synchronous>, transform_indices = @transform_10, window_bounds = array<i64: 16, 1>}, {pipeline_mode = #tpu.pipeline_mode<synchronous>, transform_indices = @transform_11, window_bounds = array<i64: 16, 1>}, {pipeline_mode = #tpu.pipeline_mode<synchronous>, transform_indices = @transform_12, window_bounds = array<i64: 1, 1>}, {transform_indices = @transform_13, window_bounds = array<i64: 1, 512>}]} {
    %c0 = arith.constant 0 : index
    %c0_0 = arith.constant 0 : index
    %0 = vector.load %arg2[%c0, %c0_0] : memref<16x6xf32, #tpu.memory_space<vmem>>, vector<16x6xf32>
    %c0_1 = arith.constant 0 : index
    %c0_2 = arith.constant 0 : index
    %1 = vector.load %arg1[%c0_1, %c0_2] : memref<512x6xf32, #tpu.memory_space<vmem>>, vector<512x6xf32>
    %cst = arith.constant dense<0.000000e+00> : vector<16x512xf32>
    %2 = tpu.matmul %0, %1, %cst {dimension_numbers = #tpu.dot_dimension_numbers<[1], [1], [0], [0], [0, 0, 1, 0], [], []>} : vector<16x6xf32>, vector<512x6xf32>, vector<16x512xf32> -> vector<16x512xf32>
    %c0_3 = arith.constant 0 : index
    %c0_4 = arith.constant 0 : index
    %3 = vector.load %arg3[%c0_3, %c0_4] : memref<16x1xf32, #tpu.memory_space<vmem>>, vector<16x1xf32>
    %4 = vector.broadcast %3 : vector<16x1xf32> to vector<16x512xf32>
    %5 = arith.addf %2, %4 : vector<16x512xf32>
    %cst_5 = arith.constant 0.00999999977 : f32
    %6 = vector.broadcast %cst_5 : f32 to vector<16x512xf32>
    %7 = arith.mulf %6, %5 : vector<16x512xf32>
    %8 = arith.maximumf %5, %7 : vector<16x512xf32>
    %c0_6 = arith.constant 0 : index
    %c0_7 = arith.constant 0 : index
    %9 = vector.load %arg4[%c0_6, %c0_7] : memref<16x16xf32, #tpu.memory_space<vmem>>, vector<16x16xf32>
    %cst_8 = arith.constant dense<0.000000e+00> : vector<16x512xf32>
    %10 = tpu.matmul %9, %8, %cst_8 {dimension_numbers = #tpu.dot_dimension_numbers<[1], [0], [0], [1], [0, 0, 1, 1], [], []>} : vector<16x16xf32>, vector<16x512xf32>, vector<16x512xf32> -> vector<16x512xf32>
    %c0_9 = arith.constant 0 : index
    %c0_10 = arith.constant 0 : index
    %11 = vector.load %arg5[%c0_9, %c0_10] : memref<16x1xf32, #tpu.memory_space<vmem>>, vector<16x1xf32>
    %12 = vector.broadcast %11 : vector<16x1xf32> to vector<16x512xf32>
    %13 = arith.addf %10, %12 : vector<16x512xf32>
    %cst_11 = arith.constant 0.00999999977 : f32
    %14 = vector.broadcast %cst_11 : f32 to vector<16x512xf32>
    %15 = arith.mulf %14, %13 : vector<16x512xf32>
    %16 = arith.maximumf %13, %15 : vector<16x512xf32>
    %17 = arith.mulf %16, %8 : vector<16x512xf32>
    %18 = arith.addf %8, %17 : vector<16x512xf32>
    %c0_12 = arith.constant 0 : index
    %c0_13 = arith.constant 0 : index
    %19 = vector.load %arg6[%c0_12, %c0_13] : memref<16x16xf32, #tpu.memory_space<vmem>>, vector<16x16xf32>
    %cst_14 = arith.constant dense<0.000000e+00> : vector<16x512xf32>
    %20 = tpu.matmul %19, %18, %cst_14 {dimension_numbers = #tpu.dot_dimension_numbers<[1], [0], [0], [1], [0, 0, 1, 1], [], []>} : vector<16x16xf32>, vector<16x512xf32>, vector<16x512xf32> -> vector<16x512xf32>
    %c0_15 = arith.constant 0 : index
    %c0_16 = arith.constant 0 : index
    %21 = vector.load %arg7[%c0_15, %c0_16] : memref<16x1xf32, #tpu.memory_space<vmem>>, vector<16x1xf32>
    %22 = vector.broadcast %21 : vector<16x1xf32> to vector<16x512xf32>
    %23 = arith.addf %20, %22 : vector<16x512xf32>
    %cst_17 = arith.constant 0.00999999977 : f32
    %24 = vector.broadcast %cst_17 : f32 to vector<16x512xf32>
    %25 = arith.mulf %24, %23 : vector<16x512xf32>
    %26 = arith.maximumf %23, %25 : vector<16x512xf32>
    %27 = arith.mulf %26, %18 : vector<16x512xf32>
    %28 = arith.addf %18, %27 : vector<16x512xf32>
    %c0_18 = arith.constant 0 : index
    %c0_19 = arith.constant 0 : index
    %29 = vector.load %arg8[%c0_18, %c0_19] : memref<16x16xf32, #tpu.memory_space<vmem>>, vector<16x16xf32>
    %cst_20 = arith.constant dense<0.000000e+00> : vector<16x512xf32>
    %30 = tpu.matmul %29, %28, %cst_20 {dimension_numbers = #tpu.dot_dimension_numbers<[1], [0], [0], [1], [0, 0, 1, 1], [], []>} : vector<16x16xf32>, vector<16x512xf32>, vector<16x512xf32> -> vector<16x512xf32>
    %c0_21 = arith.constant 0 : index
    %c0_22 = arith.constant 0 : index
    %31 = vector.load %arg9[%c0_21, %c0_22] : memref<16x1xf32, #tpu.memory_space<vmem>>, vector<16x1xf32>
    %32 = vector.broadcast %31 : vector<16x1xf32> to vector<16x512xf32>
    %33 = arith.addf %30, %32 : vector<16x512xf32>
    %cst_23 = arith.constant 0.00999999977 : f32
    %34 = vector.broadcast %cst_23 : f32 to vector<16x512xf32>
    %35 = arith.mulf %34, %33 : vector<16x512xf32>
    %36 = arith.maximumf %33, %35 : vector<16x512xf32>
    %c0_24 = arith.constant 0 : index
    %c0_25 = arith.constant 0 : index
    %37 = vector.load %arg10[%c0_24, %c0_25] : memref<16x16xf32, #tpu.memory_space<vmem>>, vector<16x16xf32>
    %cst_26 = arith.constant dense<0.000000e+00> : vector<16x512xf32>
    %38 = tpu.matmul %37, %36, %cst_26 {dimension_numbers = #tpu.dot_dimension_numbers<[1], [0], [0], [1], [0, 0, 1, 1], [], []>} : vector<16x16xf32>, vector<16x512xf32>, vector<16x512xf32> -> vector<16x512xf32>
    %c0_27 = arith.constant 0 : index
    %c0_28 = arith.constant 0 : index
    %39 = vector.load %arg11[%c0_27, %c0_28] : memref<16x1xf32, #tpu.memory_space<vmem>>, vector<16x1xf32>
    %40 = vector.broadcast %39 : vector<16x1xf32> to vector<16x512xf32>
    %41 = arith.addf %38, %40 : vector<16x512xf32>
    %cst_29 = arith.constant 0.00999999977 : f32
    %42 = vector.broadcast %cst_29 : f32 to vector<16x512xf32>
    %43 = arith.mulf %42, %41 : vector<16x512xf32>
    %44 = arith.maximumf %41, %43 : vector<16x512xf32>
    %c0_30 = arith.constant 0 : index
    %c0_31 = arith.constant 0 : index
    %45 = vector.load %arg12[%c0_30, %c0_31] : memref<16x1xf32, #tpu.memory_space<vmem>>, vector<16x1xf32>
    %46 = vector.broadcast %45 : vector<16x1xf32> to vector<16x512xf32>
    %47 = arith.mulf %44, %46 : vector<16x512xf32>
    %cst_32 = arith.constant dense<0.000000e+00> : vector<512xf32>
    %48 = vector.multi_reduction <add>, %47, %cst_32 [0] : vector<16x512xf32> to vector<512xf32>
    %49 = vector.shape_cast %48 : vector<512xf32> to vector<1x512xf32>
    %c0_33 = arith.constant 0 : index
    %c0_34 = arith.constant 0 : index
    %50 = vector.load %arg13[%c0_33, %c0_34] : memref<1x1xf32, #tpu.memory_space<vmem>>, vector<1x1xf32>
    %51 = vector.broadcast %50 : vector<1x1xf32> to vector<1x512xf32>
    %52 = arith.addf %49, %51 : vector<1x512xf32>
    %c0_35 = arith.constant 0 : index
    %c0_36 = arith.constant 0 : index
    %53 = vector.load %arg14[%c0_35, %c0_36] : memref<1x512xf32, #tpu.memory_space<vmem>>, vector<1x512xf32>
    tpu.vector_store %arg14[%c0_35, %c0_36], %52 {strides = array<i32>} : memref<1x512xf32, #tpu.memory_space<vmem>>, vector<1x512xf32>,
    return
  }
  func.func @transform_0(%arg0: i32) -> (i32, i32) {
    %c0_i32 = arith.constant 0 : i32
    %c0_i32_0 = arith.constant 0 : i32
    return %arg0, %c0_i32 : i32, i32
  }
  func.func @transform_1(%arg0: i32) -> (i32, i32) {
    %c0_i32 = arith.constant 0 : i32
    %c0_i32_0 = arith.constant 0 : i32
    %c0_i32_1 = arith.constant 0 : i32
    return %c0_i32, %c0_i32_0 : i32, i32
  }
  func.func @transform_2(%arg0: i32) -> (i32, i32) {
    %c0_i32 = arith.constant 0 : i32
    %c0_i32_0 = arith.constant 0 : i32
    %c0_i32_1 = arith.constant 0 : i32
    return %c0_i32, %c0_i32_0 : i32, i32
  }
  func.func @transform_3(%arg0: i32) -> (i32, i32) {
    %c0_i32 = arith.constant 0 : i32
    %c0_i32_0 = arith.constant 0 : i32
    %c0_i32_1 = arith.constant 0 : i32
    return %c0_i32, %c0_i32_0 : i32, i32
  }
  func.func @transform_4(%arg0: i32) -> (i32, i32) {
    %c0_i32 = arith.constant 0 : i32
    %c0_i32_0 = arith.constant 0 : i32
    %c0_i32_1 = arith.constant 0 : i32
    return %c0_i32, %c0_i32_0 : i32, i32
  }
  func.func @transform_5(%arg0: i32) -> (i32, i32) {
    %c0_i32 = arith.constant 0 : i32
    %c0_i32_0 = arith.constant 0 : i32
    %c0_i32_1 = arith.constant 0 : i32
    return %c0_i32, %c0_i32_0 : i32, i32
  }
  func.func @transform_6(%arg0: i32) -> (i32, i32) {
    %c0_i32 = arith.constant 0 : i32
    %c0_i32_0 = arith.constant 0 : i32
    %c0_i32_1 = arith.constant 0 : i32
    return %c0_i32, %c0_i32_0 : i32, i32
  }
  func.func @transform_7(%arg0: i32) -> (i32, i32) {
    %c0_i32 = arith.constant 0 : i32
    %c0_i32_0 = arith.constant 0 : i32
    %c0_i32_1 = arith.constant 0 : i32
    return %c0_i32, %c0_i32_0 : i32, i32
  }
  func.func @transform_8(%arg0: i32) -> (i32, i32) {
    %c0_i32 = arith.constant 0 : i32
    %c0_i32_0 = arith.constant 0 : i32
    %c0_i32_1 = arith.constant 0 : i32
    return %c0_i32, %c0_i32_0 : i32, i32
  }
  func.func @transform_9(%arg0: i32) -> (i32, i32) {
    %c0_i32 = arith.constant 0 : i32
    %c0_i32_0 = arith.constant 0 : i32
    %c0_i32_1 = arith.constant 0 : i32
    return %c0_i32, %c0_i32_0 : i32, i32
  }
  func.func @transform_10(%arg0: i32) -> (i32, i32) {
    %c0_i32 = arith.constant 0 : i32
    %c0_i32_0 = arith.constant 0 : i32
    %c0_i32_1 = arith.constant 0 : i32
    return %c0_i32, %c0_i32_0 : i32, i32
  }
  func.func @transform_11(%arg0: i32) -> (i32, i32) {
    %c0_i32 = arith.constant 0 : i32
    %c0_i32_0 = arith.constant 0 : i32
    %c0_i32_1 = arith.constant 0 : i32
    return %c0_i32, %c0_i32_0 : i32, i32
  }
  func.func @transform_12(%arg0: i32) -> (i32, i32) {
    %c0_i32 = arith.constant 0 : i32
    %c0_i32_0 = arith.constant 0 : i32
    %c0_i32_1 = arith.constant 0 : i32
    return %c0_i32, %c0_i32_0 : i32, i32
  }
  func.func @transform_13(%arg0: i32) -> (i32, i32) {
    %c0_i32 = arith.constant 0 : i32
    %c0_i32_0 = arith.constant 0 : i32
    return %c0_i32, %arg0 : i32, i32
  }
}

</mosaic_0001>

<llo_original>
// kernel: mnn_forward.1
$region0: #{mnn_forward.1}
  #allocation0 [shape = 'u32[]', space=smem, size = 0x4, offset = 0x4, fixed_abs, tag = 'smem constant byte address 0x4 - core index']
  #allocation1 [shape = 'u32[144,128]{1,0:T(1,128)}', space=vmem, size = 0x12000, scoped, tag = 'internal scratch']
  #allocation2 [shape = 'f32[1,1]{1,0:T(1,128)S(1)}', space=vmem, size = 0x200, scoped, tag = 'scoped memory for mnn_forward.1']
  %s0 = inlined_call_operand.vmem [shape: f32[600,6], index: 0, kind: input, shape index: {}]
  %s1 = inlined_call_operand.vmem [shape: f32[16,6], index: 1, kind: input, shape index: {}]
  %s2 = inlined_call_operand.vmem [shape: f32[16,1], index: 2, kind: input, shape index: {}]
  %s3 = inlined_call_operand.vmem [shape: f32[16,16], index: 3, kind: input, shape index: {}]
  %s4 = inlined_call_operand.vmem [shape: f32[16,1], index: 4, kind: input, shape index: {}]
  %s5 = inlined_call_operand.vmem [shape: f32[16,16], index: 5, kind: input, shape index: {}]
  %s6 = inlined_call_operand.vmem [shape: f32[16,1], index: 6, kind: input, shape index: {}]
  %s7 = inlined_call_operand.vmem [shape: f32[16,16], index: 7, kind: input, shape index: {}]
  %s8 = inlined_call_operand.vmem [shape: f32[16,1], index: 8, kind: input, shape index: {}]
  %s9 = inlined_call_operand.vmem [shape: f32[16,16], index: 9, kind: input, shape index: {}]
  %s10 = inlined_call_operand.vmem [shape: f32[16,1], index: 10, kind: input, shape index: {}]
  %s11 = inlined_call_operand.vmem [shape: f32[16,1], index: 11, kind: input, shape index: {}]
  %s12 = inlined_call_operand.<no memory space> [shape: f32[1,1], index: 12, kind: input, shape index: {}]
  %s13 = inlined_call_operand.hbm [shape: f32[1,600], index: 13, kind: output, shape index: {}]
  %s14 = sld [smem:[#allocation0]]
  $region85: #{mnn_forward.1} parent=0
    _
  %s16 = ssub.s32 1, %s14
  %s17 = scalar_select 0, %s16, %s14
  %v18 = vstv %s12
  %19 = vst [vmem:[#allocation2] sm:$0x1] %v18
  $region1: #{mnn_forward.1} parent=0
    #allocation3 [shape = 'u8[4096]{0}', space=vmem, size = 0x1000, scoped, tag = 'output window, operand 0']
    #allocation4 [shape = 's32[2]{0}', space=sflag, size = 0x8, scoped, tag = 'scoped memory for mnn_forward.1']
    %20 = vsyncpa [#allocation4], 0
    %s21 = scalar_lea.sflag [#allocation4], 1
    %22 = vsyncpa %s21, 0
    loop: start=0, step=1, limit=4
    $region2: #{mnn_forward.1} parent=1 // loop_pre_header
      _
    $region3: #{mnn_forward.1} parent=1 // loop_header
      %s24 = sphi 0, %s28
      %p25 = scmp.ge.s32.totalorder %s24, 4
      %s34 = sphi 0, %s36
      %s37 = sphi 0, %s34
      %s38 = sphi 0, %s37
      %s54 = sphi 0, %s38
      %s58 = sphi 0, %s58
      %s60 = sphi 0, %s58
      %s61 = sphi 0, %s60
      %s75 = sphi 0, %s61
      %s79 = sphi 0, %s79
      %s81 = sphi 0, %s79
      %s82 = sphi 0, %s81
      %s96 = sphi 0, %s82
      %s100 = sphi 0, %s100
      %s102 = sphi 0, %s100
      %s103 = sphi 0, %s102
      %s117 = sphi 0, %s103
      %s121 = sphi 0, %s121
      %s123 = sphi 0, %s121
      %s124 = sphi 0, %s123
      %s138 = sphi 0, %s124
      %s142 = sphi 0, %s142
      %s144 = sphi 0, %s142
      %s145 = sphi 0, %s144
      %s159 = sphi 0, %s145
      %s163 = sphi 0, %s163
      %s165 = sphi 0, %s163
      %s166 = sphi 0, %s165
      %s180 = sphi 0, %s166
      %s184 = sphi 0, %s184
      %s186 = sphi 0, %s184
      %s187 = sphi 0, %s186
      %s201 = sphi 0, %s187
      %s205 = sphi 0, %s205
      %s207 = sphi 0, %s205
      %s208 = sphi 0, %s207
      %s222 = sphi 0, %s208
      %s226 = sphi 0, %s226
      %s228 = sphi 0, %s226
      %s229 = sphi 0, %s228
      %s243 = sphi 0, %s229
      %s247 = sphi 0, %s247
      %s249 = sphi 0, %s247
      %s250 = sphi 0, %s249
      %s264 = sphi 0, %s250
      %s268 = sphi 0, %s268
      %s270 = sphi 0, %s268
      %s271 = sphi 0, %s270
      %s285 = sphi 0, %s271
      %s289 = sphi 0, %s289
      %s291 = sphi 0, %s289
      %s292 = sphi 0, %s291
      %s306 = sphi 0, %s292
      %s312 = sphi 0, %s314
      %s315 = sphi 0, %s312
      %s316 = sphi 0, %s315
      %s332 = sphi 0, %s316
    $region4: #{mnn_forward.1} parent=1 // loop_header_branch
      %27 = sbr.rel (%p25) target = $region8
    $region5: #{mnn_forward.1} parent=1 // loop_body
      %s29 = ssub.s32 %s24, 1
      %s30 = ssub.s32 %s24, 2
      %s31 = sadd.s32 %s24, 1
      %s32 = ssub.s32 %s24, %s31
      %p33 = scmp.eq.s32.totalorder %s32, 0
      %s35 = sadd.s32 %s34, 1
      %s36 = scalar_select %p33, %s34, %s35
      %p39 = pneg %p33
      %p40 = scmp.eq.s32.totalorder %s24, 1
      %p41 = por %p39, %p40
      %p42 = scmp.ne.s32.totalorder %s34, %s37
      %p43 = scmp.eq.s32.totalorder %s24, 0
      %p44 = por %p42, %p43
      %p45 = scmp.ne.s32.totalorder %s34, %s37
      %p46 = scmp.eq.s32.totalorder %s29, 1
      %p47 = por %p45, %p46
      %p48 = scmp.ne.s32.totalorder %s37, %s38
      %p49 = scmp.eq.s32.totalorder %s29, 0
      %p50 = por %p48, %p49
      %p51 = scmp.ne.s32.totalorder %s37, %s38
      %p52 = scmp.eq.s32.totalorder %s30, 1
      %p53 = por %p51, %p52
      %p55 = scmp.ne.s32.totalorder %s38, %s54
      %p56 = scmp.eq.s32.totalorder %s30, 0
      %p57 = por %p55, %p56
      %s59 = sadd.s32 %s58, 1
      %p62 = scmp.eq.s32.totalorder %s24, 1
      %p63 = scmp.ne.s32.totalorder %s58, %s60
      %p64 = scmp.eq.s32.totalorder %s24, 0
      %p65 = por %p63, %p64
      %p66 = scmp.ne.s32.totalorder %s58, %s60
      %p67 = scmp.eq.s32.totalorder %s29, 1
      %p68 = por %p66, %p67
      %p69 = scmp.ne.s32.totalorder %s60, %s61
      %p70 = scmp.eq.s32.totalorder %s29, 0
      %p71 = por %p69, %p70
      %p72 = scmp.ne.s32.totalorder %s60, %s61
      %p73 = scmp.eq.s32.totalorder %s30, 1
      %p74 = por %p72, %p73
      %p76 = scmp.ne.s32.totalorder %s61, %s75
      %p77 = scmp.eq.s32.totalorder %s30, 0
      %p78 = por %p76, %p77
      %s80 = sadd.s32 %s79, 1
      %p83 = scmp.eq.s32.totalorder %s24, 1
      %p84 = scmp.ne.s32.totalorder %s79, %s81
      %p85 = scmp.eq.s32.totalorder %s24, 0
      %p86 = por %p84, %p85
      %p87 = scmp.ne.s32.totalorder %s79, %s81
      %p88 = scmp.eq.s32.totalorder %s29, 1
      %p89 = por %p87, %p88
      %p90 = scmp.ne.s32.totalorder %s81, %s82
      %p91 = scmp.eq.s32.totalorder %s29, 0
      %p92 = por %p90, %p91
      %p93 = scmp.ne.s32.totalorder %s81, %s82
      %p94 = scmp.eq.s32.totalorder %s30, 1
      %p95 = por %p93, %p94
      %p97 = scmp.ne.s32.totalorder %s82, %s96
      %p98 = scmp.eq.s32.totalorder %s30, 0
      %p99 = por %p97, %p98
      %s101 = sadd.s32 %s100, 1
      %p104 = scmp.eq.s32.totalorder %s24, 1
      %p105 = scmp.ne.s32.totalorder %s100, %s102
      %p106 = scmp.eq.s32.totalorder %s24, 0
      %p107 = por %p105, %p106
      %p108 = scmp.ne.s32.totalorder %s100, %s102
      %p109 = scmp.eq.s32.totalorder %s29, 1
      %p110 = por %p108, %p109
      %p111 = scmp.ne.s32.totalorder %s102, %s103
      %p112 = scmp.eq.s32.totalorder %s29, 0
      %p113 = por %p111, %p112
      %p114 = scmp.ne.s32.totalorder %s102, %s103
      %p115 = scmp.eq.s32.totalorder %s30, 1
      %p116 = por %p114, %p115
      %p118 = scmp.ne.s32.totalorder %s103, %s117
      %p119 = scmp.eq.s32.totalorder %s30, 0
      %p120 = por %p118, %p119
      %s122 = sadd.s32 %s121, 1
      %p125 = scmp.eq.s32.totalorder %s24, 1
      %p126 = scmp.ne.s32.totalorder %s121, %s123
      %p127 = scmp.eq.s32.totalorder %s24, 0
      %p128 = por %p126, %p127
      %p129 = scmp.ne.s32.totalorder %s121, %s123
      %p130 = scmp.eq.s32.totalorder %s29, 1
      %p131 = por %p129, %p130
      %p132 = scmp.ne.s32.totalorder %s123, %s124
      %p133 = scmp.eq.s32.totalorder %s29, 0
      %p134 = por %p132, %p133
      %p135 = scmp.ne.s32.totalorder %s123, %s124
      %p136 = scmp.eq.s32.totalorder %s30, 1
      %p137 = por %p135, %p136
      %p139 = scmp.ne.s32.totalorder %s124, %s138
      %p140 = scmp.eq.s32.totalorder %s30, 0
      %p141 = por %p139, %p140
      %s143 = sadd.s32 %s142, 1
      %p146 = scmp.eq.s32.totalorder %s24, 1
      %p147 = scmp.ne.s32.totalorder %s142, %s144
      %p148 = scmp.eq.s32.totalorder %s24, 0
      %p149 = por %p147, %p148
      %p150 = scmp.ne.s32.totalorder %s142, %s144
      %p151 = scmp.eq.s32.totalorder %s29, 1
      %p152 = por %p150, %p151
      %p153 = scmp.ne.s32.totalorder %s144, %s145
      %p154 = scmp.eq.s32.totalorder %s29, 0
      %p155 = por %p153, %p154
      %p156 = scmp.ne.s32.totalorder %s144, %s145
      %p157 = scmp.eq.s32.totalorder %s30, 1
      %p158 = por %p156, %p157
      %p160 = scmp.ne.s32.totalorder %s145, %s159
      %p161 = scmp.eq.s32.totalorder %s30, 0
      %p162 = por %p160, %p161
      %s164 = sadd.s32 %s163, 1
      %p167 = scmp.eq.s32.totalorder %s24, 1
      %p168 = scmp.ne.s32.totalorder %s163, %s165
      %p169 = scmp.eq.s32.totalorder %s24, 0
      %p170 = por %p168, %p169
      %p171 = scmp.ne.s32.totalorder %s163, %s165
      %p172 = scmp.eq.s32.totalorder %s29, 1
      %p173 = por %p171, %p172
      %p174 = scmp.ne.s32.totalorder %s165, %s166
      %p175 = scmp.eq.s32.totalorder %s29, 0
      %p176 = por %p174, %p175
      %p177 = scmp.ne.s32.totalorder %s165, %s166
      %p178 = scmp.eq.s32.totalorder %s30, 1
      %p179 = por %p177, %p178
      %p181 = scmp.ne.s32.totalorder %s166, %s180
      %p182 = scmp.eq.s32.totalorder %s30, 0
      %p183 = por %p181, %p182
      %s185 = sadd.s32 %s184, 1
      %p188 = scmp.eq.s32.totalorder %s24, 1
      %p189 = scmp.ne.s32.totalorder %s184, %s186
      %p190 = scmp.eq.s32.totalorder %s24, 0
      %p191 = por %p189, %p190
      %p192 = scmp.ne.s32.totalorder %s184, %s186
      %p193 = scmp.eq.s32.totalorder %s29, 1
      %p194 = por %p192, %p193
      %p195 = scmp.ne.s32.totalorder %s186, %s187
      %p196 = scmp.eq.s32.totalorder %s29, 0
      %p197 = por %p195, %p196
      %p198 = scmp.ne.s32.totalorder %s186, %s187
      %p199 = scmp.eq.s32.totalorder %s30, 1
      %p200 = por %p198, %p199
      %p202 = scmp.ne.s32.totalorder %s187, %s201
      %p203 = scmp.eq.s32.totalorder %s30, 0
      %p204 = por %p202, %p203
      %s206 = sadd.s32 %s205, 1
      %p209 = scmp.eq.s32.totalorder %s24, 1
      %p210 = scmp.ne.s32.totalorder %s205, %s207
      %p211 = scmp.eq.s32.totalorder %s24, 0
      %p212 = por %p210, %p211
      %p213 = scmp.ne.s32.totalorder %s205, %s207
      %p214 = scmp.eq.s32.totalorder %s29, 1
      %p215 = por %p213, %p214
      %p216 = scmp.ne.s32.totalorder %s207, %s208
      %p217 = scmp.eq.s32.totalorder %s29, 0
      %p218 = por %p216, %p217
      %p219 = scmp.ne.s32.totalorder %s207, %s208
      %p220 = scmp.eq.s32.totalorder %s30, 1
      %p221 = por %p219, %p220
      %p223 = scmp.ne.s32.totalorder %s208, %s222
      %p224 = scmp.eq.s32.totalorder %s30, 0
      %p225 = por %p223, %p224
      %s227 = sadd.s32 %s226, 1
      %p230 = scmp.eq.s32.totalorder %s24, 1
      %p231 = scmp.ne.s32.totalorder %s226, %s228
      %p232 = scmp.eq.s32.totalorder %s24, 0
      %p233 = por %p231, %p232
      %p234 = scmp.ne.s32.totalorder %s226, %s228
      %p235 = scmp.eq.s32.totalorder %s29, 1
      %p236 = por %p234, %p235
      %p237 = scmp.ne.s32.totalorder %s228, %s229
      %p238 = scmp.eq.s32.totalorder %s29, 0
      %p239 = por %p237, %p238
      %p240 = scmp.ne.s32.totalorder %s228, %s229
      %p241 = scmp.eq.s32.totalorder %s30, 1
      %p242 = por %p240, %p241
      %p244 = scmp.ne.s32.totalorder %s229, %s243
      %p245 = scmp.eq.s32.totalorder %s30, 0
      %p246 = por %p244, %p245
      %s248 = sadd.s32 %s247, 1
      %p251 = scmp.eq.s32.totalorder %s24, 1
      %p252 = scmp.ne.s32.totalorder %s247, %s249
      %p253 = scmp.eq.s32.totalorder %s24, 0
      %p254 = por %p252, %p253
      %p255 = scmp.ne.s32.totalorder %s247, %s249
      %p256 = scmp.eq.s32.totalorder %s29, 1
      %p257 = por %p255, %p256
      %p258 = scmp.ne.s32.totalorder %s249, %s250
      %p259 = scmp.eq.s32.totalorder %s29, 0
      %p260 = por %p258, %p259
      %p261 = scmp.ne.s32.totalorder %s249, %s250
      %p262 = scmp.eq.s32.totalorder %s30, 1
      %p263 = por %p261, %p262
      %p265 = scmp.ne.s32.totalorder %s250, %s264
      %p266 = scmp.eq.s32.totalorder %s30, 0
      %p267 = por %p265, %p266
      %s269 = sadd.s32 %s268, 1
      %p272 = scmp.eq.s32.totalorder %s24, 1
      %p273 = scmp.ne.s32.totalorder %s268, %s270
      %p274 = scmp.eq.s32.totalorder %s24, 0
      %p275 = por %p273, %p274
      %p276 = scmp.ne.s32.totalorder %s268, %s270
      %p277 = scmp.eq.s32.totalorder %s29, 1
      %p278 = por %p276, %p277
      %p279 = scmp.ne.s32.totalorder %s270, %s271
      %p280 = scmp.eq.s32.totalorder %s29, 0
      %p281 = por %p279, %p280
      %p282 = scmp.ne.s32.totalorder %s270, %s271
      %p283 = scmp.eq.s32.totalorder %s30, 1
      %p284 = por %p282, %p283
      %p286 = scmp.ne.s32.totalorder %s271, %s285
      %p287 = scmp.eq.s32.totalorder %s30, 0
      %p288 = por %p286, %p287
      %s290 = sadd.s32 %s289, 1
      %p293 = scmp.eq.s32.totalorder %s24, 1
      %p294 = scmp.ne.s32.totalorder %s289, %s291
      %p295 = scmp.eq.s32.totalorder %s24, 0
      %p296 = por %p294, %p295
      %p297 = scmp.ne.s32.totalorder %s289, %s291
      %p298 = scmp.eq.s32.totalorder %s29, 1
      %p299 = por %p297, %p298
      %p300 = scmp.ne.s32.totalorder %s291, %s292
      %p301 = scmp.eq.s32.totalorder %s29, 0
      %p302 = por %p300, %p301
      %p303 = scmp.ne.s32.totalorder %s291, %s292
      %p304 = scmp.eq.s32.totalorder %s30, 1
      %p305 = por %p303, %p304
      %p307 = scmp.ne.s32.totalorder %s292, %s306
      %p308 = scmp.eq.s32.totalorder %s30, 0
      %p309 = por %p307, %p308
      %s310 = ssub.s32 %s24, %s31
      %p311 = scmp.eq.s32.totalorder %s310, 0
      %s313 = sadd.s32 %s312, 1
      %s314 = scalar_select %p311, %s312, %s313
      %p317 = pneg %p311
      %p318 = scmp.eq.s32.totalorder %s24, 1
      %p319 = por %p317, %p318
      %p320 = scmp.ne.s32.totalorder %s312, %s315
      %p321 = scmp.eq.s32.totalorder %s24, 0
      %p322 = por %p320, %p321
      %p323 = scmp.ne.s32.totalorder %s312, %s315
      %p324 = scmp.eq.s32.totalorder %s29, 1
      %p325 = por %p323, %p324
      %p326 = scmp.ne.s32.totalorder %s315, %s316
      %p327 = scmp.eq.s32.totalorder %s29, 0
      %p328 = por %p326, %p327
      %p329 = scmp.ne.s32.totalorder %s315, %s316
      %p330 = scmp.eq.s32.totalorder %s30, 1
      %p331 = por %p329, %p330
      %p333 = scmp.ne.s32.totalorder %s316, %s332
      %p334 = scmp.eq.s32.totalorder %s30, 0
      %p335 = por %p333, %p334
      %p336 = scmp.le.s32.totalorder 1, %s24
      %p337 = scmp.lt.s32.totalorder %s24, 3
      %p338 = pnand %p336, %p337
      %p339 = pneg %p338
      // Predicated region
      $region9: #{mnn_forward.1} parent=5 // pred_check
        _
      $region10: #{mnn_forward.1} parent=5 // pred_check_branch
        %341 = sbr.rel (%p338) target = $region12
      $region11: #{mnn_forward.1} parent=5 // pred_region
        %s342 = ssub.s32 %s24, 1
        // Predicated region
        $region13: #{mnn_forward.1} parent=11 // pred_check
          %p343 = pneg %p71
        $region14: #{mnn_forward.1} parent=11 // pred_check_branch
          %345 = sbr.rel (%p343) target = $region16
        $region15: #{mnn_forward.1} parent=11 // pred_region
          _
        $region16: #{mnn_forward.1} parent=11 // pred_fallthru
          _
        // Predicated region
        $region17: #{mnn_forward.1} parent=11 // pred_check
          %p346 = pneg %p92
        $region18: #{mnn_forward.1} parent=11 // pred_check_branch
          %348 = sbr.rel (%p346) target = $region20
        $region19: #{mnn_forward.1} parent=11 // pred_region
          _
        $region20: #{mnn_forward.1} parent=11 // pred_fallthru
          _
        // Predicated region
        $region21: #{mnn_forward.1} parent=11 // pred_check
          %p349 = pneg %p113
        $region22: #{mnn_forward.1} parent=11 // pred_check_branch
          %351 = sbr.rel (%p349) target = $region24
        $region23: #{mnn_forward.1} parent=11 // pred_region
          _
        $region24: #{mnn_forward.1} parent=11 // pred_fallthru
          _
        // Predicated region
        $region25: #{mnn_forward.1} parent=11 // pred_check
          %p352 = pneg %p134
        $region26: #{mnn_forward.1} parent=11 // pred_check_branch
          %354 = sbr.rel (%p352) target = $region28
        $region27: #{mnn_forward.1} parent=11 // pred_region
          _
        $region28: #{mnn_forward.1} parent=11 // pred_fallthru
          _
        // Predicated region
        $region29: #{mnn_forward.1} parent=11 // pred_check
          %p355 = pneg %p155
        $region30: #{mnn_forward.1} parent=11 // pred_check_branch
          %357 = sbr.rel (%p355) target = $region32
        $region31: #{mnn_forward.1} parent=11 // pred_region
          _
        $region32: #{mnn_forward.1} parent=11 // pred_fallthru
          _
        // Predicated region
        $region33: #{mnn_forward.1} parent=11 // pred_check
          %p358 = pneg %p176
        $region34: #{mnn_forward.1} parent=11 // pred_check_branch
          %360 = sbr.rel (%p358) target = $region36
        $region35: #{mnn_forward.1} parent=11 // pred_region
          _
        $region36: #{mnn_forward.1} parent=11 // pred_fallthru
          _
        // Predicated region
        $region37: #{mnn_forward.1} parent=11 // pred_check
          %p361 = pneg %p197
        $region38: #{mnn_forward.1} parent=11 // pred_check_branch
          %363 = sbr.rel (%p361) target = $region40
        $region39: #{mnn_forward.1} parent=11 // pred_region
          _
        $region40: #{mnn_forward.1} parent=11 // pred_fallthru
          _
        // Predicated region
        $region41: #{mnn_forward.1} parent=11 // pred_check
          %p364 = pneg %p218
        $region42: #{mnn_forward.1} parent=11 // pred_check_branch
          %366 = sbr.rel (%p364) target = $region44
        $region43: #{mnn_forward.1} parent=11 // pred_region
          _
        $region44: #{mnn_forward.1} parent=11 // pred_fallthru
          _
        // Predicated region
        $region45: #{mnn_forward.1} parent=11 // pred_check
          %p367 = pneg %p239
        $region46: #{mnn_forward.1} parent=11 // pred_check_branch
          %369 = sbr.rel (%p367) target = $region48
        $region47: #{mnn_forward.1} parent=11 // pred_region
          _
        $region48: #{mnn_forward.1} parent=11 // pred_fallthru
          _
        // Predicated region
        $region49: #{mnn_forward.1} parent=11 // pred_check
          %p370 = pneg %p260
        $region50: #{mnn_forward.1} parent=11 // pred_check_branch
          %372 = sbr.rel (%p370) target = $region52
        $region51: #{mnn_forward.1} parent=11 // pred_region
          _
        $region52: #{mnn_forward.1} parent=11 // pred_fallthru
          _
        // Predicated region
        $region53: #{mnn_forward.1} parent=11 // pred_check
          %p373 = pneg %p281
        $region54: #{mnn_forward.1} parent=11 // pred_check_branch
          %375 = sbr.rel (%p373) target = $region56
        $region55: #{mnn_forward.1} parent=11 // pred_region
          _
        $region56: #{mnn_forward.1} parent=11 // pred_fallthru
          _
        // Predicated region
        $region57: #{mnn_forward.1} parent=11 // pred_check
          %p376 = pneg %p302
        $region58: #{mnn_forward.1} parent=11 // pred_check_branch
          %378 = sbr.rel (%p376) target = $region60
        $region59: #{mnn_forward.1} parent=11 // pred_region
          _
        $region60: #{mnn_forward.1} parent=11 // pred_fallthru
          _
      $region12: #{mnn_forward.1} parent=5 // pred_fallthru
        _
      %p379 = scmp.lt.s32.totalorder %s24, 2
      // Predicated region
      $region61: #{mnn_forward.1} parent=5 // pred_check
        %p380 = pneg %p379
      $region62: #{mnn_forward.1} parent=5 // pred_check_branch
        %382 = sbr.rel (%p380) target = $region64
      $region63: #{mnn_forward.1} parent=5 // pred_region
        // Predicated region
        $region65: #{mnn_forward.1} parent=63 // pred_check
          %p383 = pneg %p44
        $region66: #{mnn_forward.1} parent=63 // pred_check_branch
          %385 = sbr.rel (%p383) target = $region68
        $region67: #{mnn_forward.1} parent=63 // pred_region
          %s386 = smul.u32 64, %s24
          %s387 = ssub.s32 75, %s386
          %p388 = scmp.lt.s32.totalorder %s387, 64
          %s389 = scalar_select %p388, %s387, 64
          %s390 = smul.u32 128, %s389
          %p391 = scmp.lt.s32.totalorder %s386, 74
          %s392 = scalar_select %p391, %s386, 74
          %s393 = smul.addr %s392, 8
          %s394 = scalar_lea.vmem %s0, %s393
          %s395 = smul.u32 64, %s24
          %s396 = ssub.s32 75, %s395
          %p397 = scmp.lt.s32.totalorder %s396, 64
          %s398 = scalar_select %p397, %s396, 64
          %s399 = smul.u32 128, %s398
        $region68: #{mnn_forward.1} parent=63 // pred_fallthru
          _
      $region64: #{mnn_forward.1} parent=5 // pred_fallthru
        _
      %p400 = scmp.le.s32.totalorder 1, %s24
      %p401 = scmp.lt.s32.totalorder %s24, 3
      %p402 = pnand %p400, %p401
      %p403 = pneg %p402
      // Predicated region
      $region69: #{mnn_forward.1} parent=5 // pred_check
        _
      $region70: #{mnn_forward.1} parent=5 // pred_check_branch
        %405 = sbr.rel (%p402) target = $region72
      $region71: #{mnn_forward.1} parent=5 // pred_region
        %s406 = ssub.s32 %s24, 1
        %s407 = smul.u32 64, %s29
        %s408 = ssub.s32 75, %s407
        %p409 = scmp.lt.s32.totalorder %s408, 64
        %s410 = scalar_select %p409, %s408, 64
        %s411 = smul.u32 128, %s410
        %p412 = scmp.lt.s32.totalorder %s407, 74
        %s413 = scalar_select %p412, %s407, 74
        %s414 = smul.addr %s413, 8
        %s415 = scalar_lea.vmem %s0, %s414
        %p416 = pneg %p50
        %p417 = pneg %p47
        %p418 = pneg %p71
        %p419 = pneg %p68
        %p420 = pneg %p92
        %p421 = pneg %p89
        %p422 = pneg %p113
        %p423 = pneg %p110
        %p424 = pneg %p134
        %p425 = pneg %p131
        %p426 = pneg %p155
        %p427 = pneg %p152
        %p428 = pneg %p176
        %p429 = pneg %p173
        %p430 = pneg %p197
        %p431 = pneg %p194
        %p432 = pneg %p218
        %p433 = pneg %p215
        %p434 = pneg %p239
        %p435 = pneg %p236
        %p436 = pneg %p260
        %p437 = pneg %p257
        %p438 = pneg %p281
        %p439 = pneg %p278
        %p440 = pneg %p302
        %p441 = pneg %p299
        %p442 = pneg %p328
        %p443 = pneg %p325
        %s444 = sand.u32 %s315, 1
        %s445 = scalar_lea.sflag [#allocation4], %s444
        %s446 = sand.u32 %s315, 1
        %s447 = smul.addr %s446, 4
        %s448 = scalar_lea.vmem [#allocation3], %s447
        %s449 = smul.u32 64, %s29
        %s450 = ssub.s32 75, %s449
        %p451 = scmp.lt.s32.totalorder %s450, 64
        %s452 = scalar_select %p451, %s450, 64
        %s453 = smul.u32 128, %s452
        %p454 = scmp.lt.s32.totalorder %s449, 74
        %s455 = scalar_select %p454, %s449, 74
        %s456 = smul.addr %s455, 8
        %s457 = scalar_lea.vmem %s0, %s456
        %s458 = smul.u32 64, %s29
        %s459 = ssub.s32 75, %s458
        %p460 = scmp.lt.s32.totalorder %s459, 64
        %s461 = scalar_select %p460, %s459, 64
        %s462 = smul.u32 128, %s461
        %s463 = smul.u32 4, %s29
        %s464 = ssub.s32 5, %s463
        %p465 = scmp.lt.s32.totalorder %s464, 4
        %s466 = scalar_select %p465, %s464, 4
        %s467 = smul.u32 16, %s466
        %v468 = vld [vmem:[%s1] sm:$0xff]
        %v469 = vld [vmem:[%s1 + $0x8] sm:$0xff]
        %v470 = vld [vmem:[%s457] sm:$0xff]
        %v471 = vld [vmem:[%s457 + $0x8] sm:$0xff]
        %v472 = vld [vmem:[%s457 + $0x10] sm:$0xff]
        %v473 = vld [vmem:[%s457 + $0x18] sm:$0xff]
        %v474 = vld [vmem:[%s457 + $0x20] sm:$0xff]
        %v475 = vld [vmem:[%s457 + $0x28] sm:$0xff]
        %v476 = vld [vmem:[%s457 + $0x30] sm:$0xff]
        %v477 = vld [vmem:[%s457 + $0x38] sm:$0xff]
        %v478 = vld [vmem:[%s457 + $0x40] sm:$0xff]
        %v479 = vld [vmem:[%s457 + $0x48] sm:$0xff]
        %v480 = vld [vmem:[%s457 + $0x50] sm:$0xff]
        %v481 = vld [vmem:[%s457 + $0x58] sm:$0xff]
        %v482 = vld [vmem:[%s457 + $0x60] sm:$0xff]
        %v483 = vld [vmem:[%s457 + $0x68] sm:$0xff]
        %v484 = vld [vmem:[%s457 + $0x70] sm:$0xff]
        %v485 = vld [vmem:[%s457 + $0x78] sm:$0xff]
        %v486 = vld [vmem:[%s457 + $0x80] sm:$0xff]
        %v487 = vld [vmem:[%s457 + $0x88] sm:$0xff]
        %v488 = vld [vmem:[%s457 + $0x90] sm:$0xff]
        %v489 = vld [vmem:[%s457 + $0x98] sm:$0xff]
        %v490 = vld [vmem:[%s457 + $0xa0] sm:$0xff]
        %v491 = vld [vmem:[%s457 + $0xa8] sm:$0xff]
        %v492 = vld [vmem:[%s457 + $0xb0] sm:$0xff]
        %v493 = vld [vmem:[%s457 + $0xb8] sm:$0xff]
        %v494 = vld [vmem:[%s457 + $0xc0] sm:$0xff]
        %v495 = vld [vmem:[%s457 + $0xc8] sm:$0xff]
        %v496 = vld [vmem:[%s457 + $0xd0] sm:$0xff]
        %v497 = vld [vmem:[%s457 + $0xd8] sm:$0xff]
        %v498 = vld [vmem:[%s457 + $0xe0] sm:$0xff]
        %v499 = vld [vmem:[%s457 + $0xe8] sm:$0xff]
        %v500 = vld [vmem:[%s457 + $0xf0] sm:$0xff]
        %v501 = vld [vmem:[%s457 + $0xf8] sm:$0xff]
        %v502 = vld [vmem:[%s457 + $0x100] sm:$0xff]
        %v503 = vld [vmem:[%s457 + $0x108] sm:$0xff]
        %v504 = vld [vmem:[%s457 + $0x110] sm:$0xff]
        %v505 = vld [vmem:[%s457 + $0x118] sm:$0xff]
        %v506 = vld [vmem:[%s457 + $0x120] sm:$0xff]
        %v507 = vld [vmem:[%s457 + $0x128] sm:$0xff]
        %v508 = vld [vmem:[%s457 + $0x130] sm:$0xff]
        %v509 = vld [vmem:[%s457 + $0x138] sm:$0xff]
        %v510 = vld [vmem:[%s457 + $0x140] sm:$0xff]
        %v511 = vld [vmem:[%s457 + $0x148] sm:$0xff]
        %v512 = vld [vmem:[%s457 + $0x150] sm:$0xff]
        %v513 = vld [vmem:[%s457 + $0x158] sm:$0xff]
        %v514 = vld [vmem:[%s457 + $0x160] sm:$0xff]
        %v515 = vld [vmem:[%s457 + $0x168] sm:$0xff]
        %v516 = vld [vmem:[%s457 + $0x170] sm:$0xff]
        %v517 = vld [vmem:[%s457 + $0x178] sm:$0xff]
        %v518 = vld [vmem:[%s457 + $0x180] sm:$0xff]
        %v519 = vld [vmem:[%s457 + $0x188] sm:$0xff]
        %v520 = vld [vmem:[%s457 + $0x190] sm:$0xff]
        %v521 = vld [vmem:[%s457 + $0x198] sm:$0xff]
        %v522 = vld [vmem:[%s457 + $0x1a0] sm:$0xff]
        %v523 = vld [vmem:[%s457 + $0x1a8] sm:$0xff]
        %v524 = vld [vmem:[%s457 + $0x1b0] sm:$0xff]
        %v525 = vld [vmem:[%s457 + $0x1b8] sm:$0xff]
        %v526 = vld [vmem:[%s457 + $0x1c0] sm:$0xff]
        %v527 = vld [vmem:[%s457 + $0x1c8] sm:$0xff]
        %v528 = vld [vmem:[%s457 + $0x1d0] sm:$0xff]
        %v529 = vld [vmem:[%s457 + $0x1d8] sm:$0xff]
        %v530 = vld [vmem:[%s457 + $0x1e0] sm:$0xff]
        %v531 = vld [vmem:[%s457 + $0x1e8] sm:$0xff]
        %v532 = vld [vmem:[%s457 + $0x1f0] sm:$0xff]
        %v533 = vld [vmem:[%s457 + $0x1f8] sm:$0xff]
        %v534 = vld [vmem:[%s2] sm:$0xff]
        %v535 = vld [vmem:[%s2 + $0x8] sm:$0xff]
        %537 = vset.pattern.permute.xlu0 0
        %538 = vperm.xlu0 %537, %v534
        %v539 = vpop.permute.xlu0 %538
        %542 = vset.pattern.permute.xlu0 0
        %543 = vperm.xlu0 %542, %v535
        %v544 = vpop.permute.xlu0 %543
        %vm546 = vcmask 48128
        %v548 = vsel %vm546, %v468, 0
        %v551 = vsel %vm546, %v469, 0
        %v554 = vsel %vm546, %v470, 0
        %v557 = vsel %vm546, %v471, 0
        %v560 = vsel %vm546, %v472, 0
        %v563 = vsel %vm546, %v473, 0
        %v566 = vsel %vm546, %v474, 0
        %v569 = vsel %vm546, %v475, 0
        %v572 = vsel %vm546, %v476, 0
        %v575 = vsel %vm546, %v477, 0
        %v578 = vsel %vm546, %v478, 0
        %v581 = vsel %vm546, %v479, 0
        %v584 = vsel %vm546, %v480, 0
        %v587 = vsel %vm546, %v481, 0
        %v590 = vsel %vm546, %v482, 0
        %v593 = vsel %vm546, %v483, 0
        %v596 = vsel %vm546, %v484, 0
        %v599 = vsel %vm546, %v485, 0
        %v602 = vsel %vm546, %v486, 0
        %v605 = vsel %vm546, %v487, 0
        %v608 = vsel %vm546, %v488, 0
        %v611 = vsel %vm546, %v489, 0
        %v614 = vsel %vm546, %v490, 0
        %v617 = vsel %vm546, %v491, 0
        %v620 = vsel %vm546, %v492, 0
        %v623 = vsel %vm546, %v493, 0
        %v626 = vsel %vm546, %v494, 0
        %v629 = vsel %vm546, %v495, 0
        %v632 = vsel %vm546, %v496, 0
        %v635 = vsel %vm546, %v497, 0
        %v638 = vsel %vm546, %v498, 0
        %v641 = vsel %vm546, %v499, 0
        %v644 = vsel %vm546, %v500, 0
        %v647 = vsel %vm546, %v501, 0
        %v650 = vsel %vm546, %v502, 0
        %v653 = vsel %vm546, %v503, 0
        %v656 = vsel %vm546, %v504, 0
        %v659 = vsel %vm546, %v505, 0
        %v662 = vsel %vm546, %v506, 0
        %v665 = vsel %vm546, %v507, 0
        %v668 = vsel %vm546, %v508, 0
        %v671 = vsel %vm546, %v509, 0
        %v674 = vsel %vm546, %v510, 0
        %v677 = vsel %vm546, %v511, 0
        %v680 = vsel %vm546, %v512, 0
        %v683 = vsel %vm546, %v513, 0
        %v686 = vsel %vm546, %v514, 0
        %v689 = vsel %vm546, %v515, 0
        %v692 = vsel %vm546, %v516, 0
        %v695 = vsel %vm546, %v517, 0
        %v698 = vsel %vm546, %v518, 0
        %v701 = vsel %vm546, %v519, 0
        %v704 = vsel %vm546, %v520, 0
        %v707 = vsel %vm546, %v521, 0
        %v710 = vsel %vm546, %v522, 0
        %v713 = vsel %vm546, %v523, 0
        %v716 = vsel %vm546, %v524, 0
        %v719 = vsel %vm546, %v525, 0
        %v722 = vsel %vm546, %v526, 0
        %v725 = vsel %vm546, %v527, 0
        %v728 = vsel %vm546, %v528, 0
        %v731 = vsel %vm546, %v529, 0
        %v734 = vsel %vm546, %v530, 0
        %v737 = vsel %vm546, %v531, 0
        %v740 = vsel %vm546, %v532, 0
        %v743 = vsel %vm546, %v533, 0
        %745 = vmatprep.subr.mxu0 0.0
        %746 = vmatpush1.xpose.msra.mxu0 %v554
        %747 = vmatprep.subr.mxu0 0.0
        %748 = vmatpush1.xpose.msra.mxu0 %v557
        %749 = vmatprep.subr.mxu0 0.0
        %750 = vmatpush1.xpose.msra.mxu0 %v560
        %751 = vmatprep.subr.mxu0 0.0
        %752 = vmatpush1.xpose.msra.mxu0 %v563
        %753 = vmatprep.subr.mxu0 0.0
        %754 = vmatpush1.xpose.msra.mxu0 %v566
        %755 = vmatprep.subr.mxu0 0.0
        %756 = vmatpush1.xpose.msra.mxu0 %v569
        %757 = vmatprep.subr.mxu0 0.0
        %758 = vmatpush1.xpose.msra.mxu0 %v572
        %759 = vmatprep.subr.mxu0 0.0
        %760 = vmatpush1.xpose.msra.mxu0 %v575
        %761 = vmatprep.subr.mxu0 0.0
        %762 = vmatpush1.xpose.msra.mxu0 %v578
        %763 = vmatprep.subr.mxu0 0.0
        %764 = vmatpush1.xpose.msra.mxu0 %v581
        %765 = vmatprep.subr.mxu0 0.0
        %766 = vmatpush1.xpose.msra.mxu0 %v584
        %767 = vmatprep.subr.mxu0 0.0
        %768 = vmatpush1.xpose.msra.mxu0 %v587
        %769 = vmatprep.subr.mxu0 0.0
        %770 = vmatpush1.xpose.msra.mxu0 %v590
        %771 = vmatprep.subr.mxu0 0.0
        %772 = vmatpush1.xpose.msra.mxu0 %v593
        %773 = vmatprep.subr.mxu0 0.0
        %774 = vmatpush1.xpose.msra.mxu0 %v596
        %775 = vmatprep.subr.mxu0 0.0
        %776 = vmatpush1.xpose.msra.mxu0 %v599
        %777 = vmatprep.subr.mxu0 0.0
        %778 = vmatpush1.xpose.msra.mxu0 %v602
        %779 = vmatprep.subr.mxu0 0.0
        %780 = vmatpush1.xpose.msra.mxu0 %v605
        %781 = vmatprep.subr.mxu0 0.0
        %782 = vmatpush1.xpose.msra.mxu0 %v608
        %783 = vmatprep.subr.mxu0 0.0
        %784 = vmatpush1.xpose.msra.mxu0 %v611
        %785 = vmatprep.subr.mxu0 0.0
        %786 = vmatpush1.xpose.msra.mxu0 %v614
        %787 = vmatprep.subr.mxu0 0.0
        %788 = vmatpush1.xpose.msra.mxu0 %v617
        %789 = vmatprep.subr.mxu0 0.0
        %790 = vmatpush1.xpose.msra.mxu0 %v620
        %791 = vmatprep.subr.mxu0 0.0
        %792 = vmatpush1.xpose.msra.mxu0 %v623
        %793 = vmatprep.subr.mxu0 0.0
        %794 = vmatpush1.xpose.msra.mxu0 %v626
        %795 = vmatprep.subr.mxu0 0.0
        %796 = vmatpush1.xpose.msra.mxu0 %v629
        %797 = vmatprep.subr.mxu0 0.0
        %798 = vmatpush1.xpose.msra.mxu0 %v632
        %799 = vmatprep.subr.mxu0 0.0
        %800 = vmatpush1.xpose.msra.mxu0 %v635
        %801 = vmatprep.subr.mxu0 0.0
        %802 = vmatpush1.xpose.msra.mxu0 %v638
        %803 = vmatprep.subr.mxu0 0.0
        %804 = vmatpush1.xpose.msra.mxu0 %v641
        %805 = vmatprep.subr.mxu0 0.0
        %806 = vmatpush1.xpose.msra.mxu0 %v644
        %807 = vmatprep.subr.mxu0 0.0
        %808 = vmatpush1.xpose.msra.mxu0 %v647
        %809 = vmatprep.mubr.f32.mxu0 0.0
        %810 = vmatmul.mubr.f32.gmra.mrb[0].mxu0 %v548
        %v811 = vpop.f32.mrb[0].mxu0
        %v812 = vadd.f32 %v539, %v811
        %v813 = vpop.f32.mrb[0].mxu0
        %v814 = vadd.f32 %v539, %v813
        %815 = vmatprep.mubr.f32.mxu0 0.0
        %816 = vmatmul.mubr.f32.gmra.mrb[0].mxu0 %v551
        %v817 = vpop.f32.mrb[0].mxu0
        %v818 = vadd.f32 %v544, %v817
        %v819 = vpop.f32.mrb[0].mxu0
        %v820 = vadd.f32 %v544, %v819
        %821 = vdwg.mxu0
        %822 = vmatprep.subr.mxu0 0.0
        %823 = vmatpush1.xpose.msra.mxu0 %v650
        %824 = vmatprep.subr.mxu0 0.0
        %825 = vmatpush1.xpose.msra.mxu0 %v653
        %826 = vmatprep.subr.mxu0 0.0
        %827 = vmatpush1.xpose.msra.mxu0 %v656
        %828 = vmatprep.subr.mxu0 0.0
        %829 = vmatpush1.xpose.msra.mxu0 %v659
        %830 = vmatprep.subr.mxu0 0.0
        %831 = vmatpush1.xpose.msra.mxu0 %v662
        %832 = vmatprep.subr.mxu0 0.0
        %833 = vmatpush1.xpose.msra.mxu0 %v665
        %834 = vmatprep.subr.mxu0 0.0
        %835 = vmatpush1.xpose.msra.mxu0 %v668
        %836 = vmatprep.subr.mxu0 0.0
        %837 = vmatpush1.xpose.msra.mxu0 %v671
        %838 = vmatprep.subr.mxu0 0.0
        %839 = vmatpush1.xpose.msra.mxu0 %v674
        %840 = vmatprep.subr.mxu0 0.0
        %841 = vmatpush1.xpose.msra.mxu0 %v677
        %842 = vmatprep.subr.mxu0 0.0
        %843 = vmatpush1.xpose.msra.mxu0 %v680
        %844 = vmatprep.subr.mxu0 0.0
        %845 = vmatpush1.xpose.msra.mxu0 %v683
        %846 = vmatprep.subr.mxu0 0.0
        %847 = vmatpush1.xpose.msra.mxu0 %v686
        %848 = vmatprep.subr.mxu0 0.0
        %849 = vmatpush1.xpose.msra.mxu0 %v689
        %850 = vmatprep.subr.mxu0 0.0
        %851 = vmatpush1.xpose.msra.mxu0 %v692
        %852 = vmatprep.subr.mxu0 0.0
        %853 = vmatpush1.xpose.msra.mxu0 %v695
        %854 = vmatprep.subr.mxu0 0.0
        %855 = vmatpush1.xpose.msra.mxu0 %v698
        %856 = vmatprep.subr.mxu0 0.0
        %857 = vmatpush1.xpose.msra.mxu0 %v701
        %858 = vmatprep.subr.mxu0 0.0
        %859 = vmatpush1.xpose.msra.mxu0 %v704
        %860 = vmatprep.subr.mxu0 0.0
        %861 = vmatpush1.xpose.msra.mxu0 %v707
        %862 = vmatprep.subr.mxu0 0.0
        %863 = vmatpush1.xpose.msra.mxu0 %v710
        %864 = vmatprep.subr.mxu0 0.0
        %865 = vmatpush1.xpose.msra.mxu0 %v713
        %866 = vmatprep.subr.mxu0 0.0
        %867 = vmatpush1.xpose.msra.mxu0 %v716
        %868 = vmatprep.subr.mxu0 0.0
        %869 = vmatpush1.xpose.msra.mxu0 %v719
        %870 = vmatprep.subr.mxu0 0.0
        %871 = vmatpush1.xpose.msra.mxu0 %v722
        %872 = vmatprep.subr.mxu0 0.0
        %873 = vmatpush1.xpose.msra.mxu0 %v725
        %874 = vmatprep.subr.mxu0 0.0
        %875 = vmatpush1.xpose.msra.mxu0 %v728
        %876 = vmatprep.subr.mxu0 0.0
        %877 = vmatpush1.xpose.msra.mxu0 %v731
        %878 = vmatprep.subr.mxu0 0.0
        %879 = vmatpush1.xpose.msra.mxu0 %v734
        %880 = vmatprep.subr.mxu0 0.0
        %881 = vmatpush1.xpose.msra.mxu0 %v737
        %882 = vmatprep.subr.mxu0 0.0
        %883 = vmatpush1.xpose.msra.mxu0 %v740
        %884 = vmatprep.subr.mxu0 0.0
        %885 = vmatpush1.xpose.msra.mxu0 %v743
        %886 = vmatprep.mubr.f32.mxu0 0.0
        %887 = vmatmul.mubr.f32.gmra.mrb[0].mxu0 %v548
        %v888 = vpop.f32.mrb[0].mxu0
        %v889 = vadd.f32 %v539, %v888
        %v890 = vpop.f32.mrb[0].mxu0
        %v891 = vadd.f32 %v539, %v890
        %892 = vmatprep.mubr.f32.mxu0 0.0
        %893 = vmatmul.mubr.f32.gmra.mrb[0].mxu0 %v551
        %v894 = vpop.f32.mrb[0].mxu0
        %v895 = vadd.f32 %v544, %v894
        %v896 = vpop.f32.mrb[0].mxu0
        %v897 = vadd.f32 %v544, %v896
        %898 = vdwg.mxu0
        %v899 = vmul.f32 %v812, 0.01
        %v900 = vmul.f32 %v814, 0.01
        %v901 = vmul.f32 %v889, 0.01
        %v902 = vmul.f32 %v891, 0.01
        %v903 = vmul.f32 %v818, 0.01
        %v904 = vmul.f32 %v820, 0.01
        %v905 = vmul.f32 %v895, 0.01
        %v906 = vmul.f32 %v897, 0.01
        %v907 = vmax.f32 %v812, %v899
        %v908 = vmax.f32 %v814, %v900
        %v909 = vmax.f32 %v889, %v901
        %v910 = vmax.f32 %v891, %v902
        %v911 = vmax.f32 %v818, %v903
        %v912 = vmax.f32 %v820, %v904
        %v913 = vmax.f32 %v895, %v905
        %v914 = vmax.f32 %v897, %v906
        %v915 = vld [vmem:[%s3] sm:$0xff]
        %v916 = vld [vmem:[%s3 + $0x8] sm:$0xff]
        %v917 = vld [vmem:[%s4] sm:$0xff]
        %v918 = vld [vmem:[%s4 + $0x8] sm:$0xff]
        %920 = vset.pattern.permute.xlu0 0
        %921 = vperm.xlu0 %920, %v917
        %v922 = vpop.permute.xlu0 %921
        %925 = vset.pattern.permute.xlu0 0
        %926 = vperm.xlu0 %925, %v918
        %v927 = vpop.permute.xlu0 %926
        %vm929 = vcmask 130048
        %v931 = vsel %vm929, %v915, 0
        %v934 = vsel %vm929, %v916, 0
        %936 = vmatprep.subr.mxu0 %v908
        %937 = vmatpush1.msra.mxu0 %v907
        %938 = vmatprep.subr.mxu0 %v912
        %939 = vmatpush1.msra.mxu0 %v911
        %940 = vmatprep.subr.mxu0 0.0
        %941 = vmatpush1.msra.mxu0 0.0
        %942 = vmatprep.subr.mxu0 0.0
        %943 = vmatpush1.msra.mxu0 0.0
        %944 = vmatprep.subr.mxu0 0.0
        %945 = vmatpush1.msra.mxu0 0.0
        %946 = vmatprep.subr.mxu0 0.0
        %947 = vmatpush1.msra.mxu0 0.0
        %948 = vmatprep.subr.mxu0 0.0
        %949 = vmatpush1.msra.mxu0 0.0
        %950 = vmatprep.subr.mxu0 0.0
        %951 = vmatpush1.msra.mxu0 0.0
        %952 = vmatprep.subr.mxu0 0.0
        %953 = vmatpush1.msra.mxu0 0.0
        %954 = vmatprep.subr.mxu0 0.0
        %955 = vmatpush1.msra.mxu0 0.0
        %956 = vmatprep.subr.mxu0 0.0
        %957 = vmatpush1.msra.mxu0 0.0
        %958 = vmatprep.subr.mxu0 0.0
        %959 = vmatpush1.msra.mxu0 0.0
        %960 = vmatprep.subr.mxu0 0.0
        %961 = vmatpush1.msra.mxu0 0.0
        %962 = vmatprep.subr.mxu0 0.0
        %963 = vmatpush1.msra.mxu0 0.0
        %964 = vmatprep.subr.mxu0 0.0
        %965 = vmatpush1.msra.mxu0 0.0
        %966 = vmatprep.subr.mxu0 0.0
        %967 = vmatpush1.msra.mxu0 0.0
        %968 = vmatprep.subr.mxu0 0.0
        %969 = vmatpush1.msra.mxu0 0.0
        %970 = vmatprep.subr.mxu0 0.0
        %971 = vmatpush1.msra.mxu0 0.0
        %972 = vmatprep.subr.mxu0 0.0
        %973 = vmatpush1.msra.mxu0 0.0
        %974 = vmatprep.subr.mxu0 0.0
        %975 = vmatpush1.msra.mxu0 0.0
        %976 = vmatprep.subr.mxu0 0.0
        %977 = vmatpush1.msra.mxu0 0.0
        %978 = vmatprep.subr.mxu0 0.0
        %979 = vmatpush1.msra.mxu0 0.0
        %980 = vmatprep.subr.mxu0 0.0
        %981 = vmatpush1.msra.mxu0 0.0
        %982 = vmatprep.subr.mxu0 0.0
        %983 = vmatpush1.msra.mxu0 0.0
        %984 = vmatprep.subr.mxu0 0.0
        %985 = vmatpush1.msra.mxu0 0.0
        %986 = vmatprep.subr.mxu0 0.0
        %987 = vmatpush1.msra.mxu0 0.0
        %988 = vmatprep.subr.mxu0 0.0
        %989 = vmatpush1.msra.mxu0 0.0
        %990 = vmatprep.subr.mxu0 0.0
        %991 = vmatpush1.msra.mxu0 0.0
        %992 = vmatprep.subr.mxu0 0.0
        %993 = vmatpush1.msra.mxu0 0.0
        %994 = vmatprep.subr.mxu0 0.0
        %995 = vmatpush1.msra.mxu0 0.0
        %996 = vmatprep.subr.mxu0 0.0
        %997 = vmatpush1.msra.mxu0 0.0
        %998 = vmatprep.subr.mxu0 0.0
        %999 = vmatpush1.msra.mxu0 0.0
        %1000 = vmatprep.mubr.f32.mxu0 0.0
        %1001 = vmatmul.mubr.f32.gmra.mrb[0].mxu0 %v931
        %v1002 = vpop.f32.mrb[0].mxu0
        %v1003 = vadd.f32 %v922, %v1002
        %v1004 = vpop.f32.mrb[0].mxu0
        %v1005 = vadd.f32 %v922, %v1004
        %1006 = vmatprep.mubr.f32.mxu0 0.0
        %1007 = vmatmul.mubr.f32.gmra.mrb[0].mxu0 %v934
        %v1008 = vpop.f32.mrb[0].mxu0
        %v1009 = vadd.f32 %v927, %v1008
        %v1010 = vpop.f32.mrb[0].mxu0
        %v1011 = vadd.f32 %v927, %v1010
        %1012 = vdwg.mxu0
        %1013 = vmatprep.subr.mxu0 %v910
        %1014 = vmatpush1.msra.mxu0 %v909
        %1015 = vmatprep.subr.mxu0 %v914
        %1016 = vmatpush1.msra.mxu0 %v913
        %1017 = vmatprep.subr.mxu0 0.0
        %1018 = vmatpush1.msra.mxu0 0.0
        %1019 = vmatprep.subr.mxu0 0.0
        %1020 = vmatpush1.msra.mxu0 0.0
        %1021 = vmatprep.subr.mxu0 0.0
        %1022 = vmatpush1.msra.mxu0 0.0
        %1023 = vmatprep.subr.mxu0 0.0
        %1024 = vmatpush1.msra.mxu0 0.0
        %1025 = vmatprep.subr.mxu0 0.0
        %1026 = vmatpush1.msra.mxu0 0.0
        %1027 = vmatprep.subr.mxu0 0.0
        %1028 = vmatpush1.msra.mxu0 0.0
        %1029 = vmatprep.subr.mxu0 0.0
        %1030 = vmatpush1.msra.mxu0 0.0
        %1031 = vmatprep.subr.mxu0 0.0
        %1032 = vmatpush1.msra.mxu0 0.0
        %1033 = vmatprep.subr.mxu0 0.0
        %1034 = vmatpush1.msra.mxu0 0.0
        %1035 = vmatprep.subr.mxu0 0.0
        %1036 = vmatpush1.msra.mxu0 0.0
        %1037 = vmatprep.subr.mxu0 0.0
        %1038 = vmatpush1.msra.mxu0 0.0
        %1039 = vmatprep.subr.mxu0 0.0
        %1040 = vmatpush1.msra.mxu0 0.0
        %1041 = vmatprep.subr.mxu0 0.0
        %1042 = vmatpush1.msra.mxu0 0.0
        %1043 = vmatprep.subr.mxu0 0.0
        %1044 = vmatpush1.msra.mxu0 0.0
        %1045 = vmatprep.subr.mxu0 0.0
        %1046 = vmatpush1.msra.mxu0 0.0
        %1047 = vmatprep.subr.mxu0 0.0
        %1048 = vmatpush1.msra.mxu0 0.0
        %1049 = vmatprep.subr.mxu0 0.0
        %1050 = vmatpush1.msra.mxu0 0.0
        %1051 = vmatprep.subr.mxu0 0.0
        %1052 = vmatpush1.msra.mxu0 0.0
        %1053 = vmatprep.subr.mxu0 0.0
        %1054 = vmatpush1.msra.mxu0 0.0
        %1055 = vmatprep.subr.mxu0 0.0
        %1056 = vmatpush1.msra.mxu0 0.0
        %1057 = vmatprep.subr.mxu0 0.0
        %1058 = vmatpush1.msra.mxu0 0.0
        %1059 = vmatprep.subr.mxu0 0.0
        %1060 = vmatpush1.msra.mxu0 0.0
        %1061 = vmatprep.subr.mxu0 0.0
        %1062 = vmatpush1.msra.mxu0 0.0
        %1063 = vmatprep.subr.mxu0 0.0
        %1064 = vmatpush1.msra.mxu0 0.0
        %1065 = vmatprep.subr.mxu0 0.0
        %1066 = vmatpush1.msra.mxu0 0.0
        %1067 = vmatprep.subr.mxu0 0.0
        %1068 = vmatpush1.msra.mxu0 0.0
        %1069 = vmatprep.subr.mxu0 0.0
        %1070 = vmatpush1.msra.mxu0 0.0
        %1071 = vmatprep.subr.mxu0 0.0
        %1072 = vmatpush1.msra.mxu0 0.0
        %1073 = vmatprep.subr.mxu0 0.0
        %1074 = vmatpush1.msra.mxu0 0.0
        %1075 = vmatprep.subr.mxu0 0.0
        %1076 = vmatpush1.msra.mxu0 0.0
        %1077 = vmatprep.mubr.f32.mxu0 0.0
        %1078 = vmatmul.mubr.f32.gmra.mrb[0].mxu0 %v931
        %v1079 = vpop.f32.mrb[0].mxu0
        %v1080 = vadd.f32 %v922, %v1079
        %v1081 = vpop.f32.mrb[0].mxu0
        %v1082 = vadd.f32 %v922, %v1081
        %1083 = vmatprep.mubr.f32.mxu0 0.0
        %1084 = vmatmul.mubr.f32.gmra.mrb[0].mxu0 %v934
        %v1085 = vpop.f32.mrb[0].mxu0
        %v1086 = vadd.f32 %v927, %v1085
        %v1087 = vpop.f32.mrb[0].mxu0
        %v1088 = vadd.f32 %v927, %v1087
        %1089 = vdwg.mxu0
        %v1090 = vmul.f32 %v1003, 0.01
        %v1091 = vmul.f32 %v1005, 0.01
        %v1092 = vmul.f32 %v1080, 0.01
        %v1093 = vmul.f32 %v1082, 0.01
        %v1094 = vmul.f32 %v1009, 0.01
        %v1095 = vmul.f32 %v1011, 0.01
        %v1096 = vmul.f32 %v1086, 0.01
        %v1097 = vmul.f32 %v1088, 0.01
        %v1098 = vmax.f32 %v1003, %v1090
        %v1099 = vmax.f32 %v1005, %v1091
        %v1100 = vmax.f32 %v1080, %v1092
        %v1101 = vmax.f32 %v1082, %v1093
        %v1102 = vmax.f32 %v1009, %v1094
        %v1103 = vmax.f32 %v1011, %v1095
        %v1104 = vmax.f32 %v1086, %v1096
        %v1105 = vmax.f32 %v1088, %v1097
        %v1106 = vmul.f32 %v1098, %v907
        %v1107 = vmul.f32 %v1099, %v908
        %v1108 = vmul.f32 %v1100, %v909
        %v1109 = vmul.f32 %v1101, %v910
        %v1110 = vmul.f32 %v1102, %v911
        %v1111 = vmul.f32 %v1103, %v912
        %v1112 = vmul.f32 %v1104, %v913
        %v1113 = vmul.f32 %v1105, %v914
        %v1114 = vadd.f32 %v907, %v1106
        %v1115 = vadd.f32 %v908, %v1107
        %v1116 = vadd.f32 %v909, %v1108
        %v1117 = vadd.f32 %v910, %v1109
        %v1118 = vadd.f32 %v911, %v1110
        %v1119 = vadd.f32 %v912, %v1111
        %v1120 = vadd.f32 %v913, %v1112
        %v1121 = vadd.f32 %v914, %v1113
        %v1122 = vld [vmem:[%s5] sm:$0xff]
        %v1123 = vld [vmem:[%s5 + $0x8] sm:$0xff]
        %v1124 = vld [vmem:[%s6] sm:$0xff]
        %v1125 = vld [vmem:[%s6 + $0x8] sm:$0xff]
        %1127 = vset.pattern.permute.xlu0 0
        %1128 = vperm.xlu0 %1127, %v1124
        %v1129 = vpop.permute.xlu0 %1128
        %1132 = vset.pattern.permute.xlu0 0
        %1133 = vperm.xlu0 %1132, %v1125
        %v1134 = vpop.permute.xlu0 %1133
        %v1137 = vsel %vm929, %v1122, 0
        %v1140 = vsel %vm929, %v1123, 0
        %1142 = vmatprep.subr.mxu0 %v1115
        %1143 = vmatpush1.msra.mxu0 %v1114
        %1144 = vmatprep.subr.mxu0 %v1119
        %1145 = vmatpush1.msra.mxu0 %v1118
        %1146 = vmatprep.subr.mxu0 0.0
        %1147 = vmatpush1.msra.mxu0 0.0
        %1148 = vmatprep.subr.mxu0 0.0
        %1149 = vmatpush1.msra.mxu0 0.0
        %1150 = vmatprep.subr.mxu0 0.0
        %1151 = vmatpush1.msra.mxu0 0.0
        %1152 = vmatprep.subr.mxu0 0.0
        %1153 = vmatpush1.msra.mxu0 0.0
        %1154 = vmatprep.subr.mxu0 0.0
        %1155 = vmatpush1.msra.mxu0 0.0
        %1156 = vmatprep.subr.mxu0 0.0
        %1157 = vmatpush1.msra.mxu0 0.0
        %1158 = vmatprep.subr.mxu0 0.0
        %1159 = vmatpush1.msra.mxu0 0.0
        %1160 = vmatprep.subr.mxu0 0.0
        %1161 = vmatpush1.msra.mxu0 0.0
        %1162 = vmatprep.subr.mxu0 0.0
        %1163 = vmatpush1.msra.mxu0 0.0
        %1164 = vmatprep.subr.mxu0 0.0
        %1165 = vmatpush1.msra.mxu0 0.0
        %1166 = vmatprep.subr.mxu0 0.0
        %1167 = vmatpush1.msra.mxu0 0.0
        %1168 = vmatprep.subr.mxu0 0.0
        %1169 = vmatpush1.msra.mxu0 0.0
        %1170 = vmatprep.subr.mxu0 0.0
        %1171 = vmatpush1.msra.mxu0 0.0
        %1172 = vmatprep.subr.mxu0 0.0
        %1173 = vmatpush1.msra.mxu0 0.0
        %1174 = vmatprep.subr.mxu0 0.0
        %1175 = vmatpush1.msra.mxu0 0.0
        %1176 = vmatprep.subr.mxu0 0.0
        %1177 = vmatpush1.msra.mxu0 0.0
        %1178 = vmatprep.subr.mxu0 0.0
        %1179 = vmatpush1.msra.mxu0 0.0
        %1180 = vmatprep.subr.mxu0 0.0
        %1181 = vmatpush1.msra.mxu0 0.0
        %1182 = vmatprep.subr.mxu0 0.0
        %1183 = vmatpush1.msra.mxu0 0.0
        %1184 = vmatprep.subr.mxu0 0.0
        %1185 = vmatpush1.msra.mxu0 0.0
        %1186 = vmatprep.subr.mxu0 0.0
        %1187 = vmatpush1.msra.mxu0 0.0
        %1188 = vmatprep.subr.mxu0 0.0
        %1189 = vmatpush1.msra.mxu0 0.0
        %1190 = vmatprep.subr.mxu0 0.0
        %1191 = vmatpush1.msra.mxu0 0.0
        %1192 = vmatprep.subr.mxu0 0.0
        %1193 = vmatpush1.msra.mxu0 0.0
        %1194 = vmatprep.subr.mxu0 0.0
        %1195 = vmatpush1.msra.mxu0 0.0
        %1196 = vmatprep.subr.mxu0 0.0
        %1197 = vmatpush1.msra.mxu0 0.0
        %1198 = vmatprep.subr.mxu0 0.0
        %1199 = vmatpush1.msra.mxu0 0.0
        %1200 = vmatprep.subr.mxu0 0.0
        %1201 = vmatpush1.msra.mxu0 0.0
        %1202 = vmatprep.subr.mxu0 0.0
        %1203 = vmatpush1.msra.mxu0 0.0
        %1204 = vmatprep.subr.mxu0 0.0
        %1205 = vmatpush1.msra.mxu0 0.0
        %1206 = vmatprep.mubr.f32.mxu0 0.0
        %1207 = vmatmul.mubr.f32.gmra.mrb[0].mxu0 %v1137
        %v1208 = vpop.f32.mrb[0].mxu0
        %v1209 = vadd.f32 %v1129, %v1208
        %v1210 = vpop.f32.mrb[0].mxu0
        %v1211 = vadd.f32 %v1129, %v1210
        %1212 = vmatprep.mubr.f32.mxu0 0.0
        %1213 = vmatmul.mubr.f32.gmra.mrb[0].mxu0 %v1140
        %v1214 = vpop.f32.mrb[0].mxu0
        %v1215 = vadd.f32 %v1134, %v1214
        %v1216 = vpop.f32.mrb[0].mxu0
        %v1217 = vadd.f32 %v1134, %v1216
        %1218 = vdwg.mxu0
        %1219 = vmatprep.subr.mxu0 %v1117
        %1220 = vmatpush1.msra.mxu0 %v1116
        %1221 = vmatprep.subr.mxu0 %v1121
        %1222 = vmatpush1.msra.mxu0 %v1120
        %1223 = vmatprep.subr.mxu0 0.0
        %1224 = vmatpush1.msra.mxu0 0.0
        %1225 = vmatprep.subr.mxu0 0.0
        %1226 = vmatpush1.msra.mxu0 0.0
        %1227 = vmatprep.subr.mxu0 0.0
        %1228 = vmatpush1.msra.mxu0 0.0
        %1229 = vmatprep.subr.mxu0 0.0
        %1230 = vmatpush1.msra.mxu0 0.0
        %1231 = vmatprep.subr.mxu0 0.0
        %1232 = vmatpush1.msra.mxu0 0.0
        %1233 = vmatprep.subr.mxu0 0.0
        %1234 = vmatpush1.msra.mxu0 0.0
        %1235 = vmatprep.subr.mxu0 0.0
        %1236 = vmatpush1.msra.mxu0 0.0
        %1237 = vmatprep.subr.mxu0 0.0
        %1238 = vmatpush1.msra.mxu0 0.0
        %1239 = vmatprep.subr.mxu0 0.0
        %1240 = vmatpush1.msra.mxu0 0.0
        %1241 = vmatprep.subr.mxu0 0.0
        %1242 = vmatpush1.msra.mxu0 0.0
        %1243 = vmatprep.subr.mxu0 0.0
        %1244 = vmatpush1.msra.mxu0 0.0
        %1245 = vmatprep.subr.mxu0 0.0
        %1246 = vmatpush1.msra.mxu0 0.0
        %1247 = vmatprep.subr.mxu0 0.0
        %1248 = vmatpush1.msra.mxu0 0.0
        %1249 = vmatprep.subr.mxu0 0.0
        %1250 = vmatpush1.msra.mxu0 0.0
        %1251 = vmatprep.subr.mxu0 0.0
        %1252 = vmatpush1.msra.mxu0 0.0
        %1253 = vmatprep.subr.mxu0 0.0
        %1254 = vmatpush1.msra.mxu0 0.0
        %1255 = vmatprep.subr.mxu0 0.0
        %1256 = vmatpush1.msra.mxu0 0.0
        %1257 = vmatprep.subr.mxu0 0.0
        %1258 = vmatpush1.msra.mxu0 0.0
        %1259 = vmatprep.subr.mxu0 0.0
        %1260 = vmatpush1.msra.mxu0 0.0
        %1261 = vmatprep.subr.mxu0 0.0
        %1262 = vmatpush1.msra.mxu0 0.0
        %1263 = vmatprep.subr.mxu0 0.0
        %1264 = vmatpush1.msra.mxu0 0.0
        %1265 = vmatprep.subr.mxu0 0.0
        %1266 = vmatpush1.msra.mxu0 0.0
        %1267 = vmatprep.subr.mxu0 0.0
        %1268 = vmatpush1.msra.mxu0 0.0
        %1269 = vmatprep.subr.mxu0 0.0
        %1270 = vmatpush1.msra.mxu0 0.0
        %1271 = vmatprep.subr.mxu0 0.0
        %1272 = vmatpush1.msra.mxu0 0.0
        %1273 = vmatprep.subr.mxu0 0.0
        %1274 = vmatpush1.msra.mxu0 0.0
        %1275 = vmatprep.subr.mxu0 0.0
        %1276 = vmatpush1.msra.mxu0 0.0
        %1277 = vmatprep.subr.mxu0 0.0
        %1278 = vmatpush1.msra.mxu0 0.0
        %1279 = vmatprep.subr.mxu0 0.0
        %1280 = vmatpush1.msra.mxu0 0.0
        %1281 = vmatprep.subr.mxu0 0.0
        %1282 = vmatpush1.msra.mxu0 0.0
        %1283 = vmatprep.mubr.f32.mxu0 0.0
        %1284 = vmatmul.mubr.f32.gmra.mrb[0].mxu0 %v1137
        %v1285 = vpop.f32.mrb[0].mxu0
        %v1286 = vadd.f32 %v1129, %v1285
        %v1287 = vpop.f32.mrb[0].mxu0
        %v1288 = vadd.f32 %v1129, %v1287
        %1289 = vmatprep.mubr.f32.mxu0 0.0
        %1290 = vmatmul.mubr.f32.gmra.mrb[0].mxu0 %v1140
        %v1291 = vpop.f32.mrb[0].mxu0
        %v1292 = vadd.f32 %v1134, %v1291
        %v1293 = vpop.f32.mrb[0].mxu0
        %v1294 = vadd.f32 %v1134, %v1293
        %1295 = vdwg.mxu0
        %v1296 = vmul.f32 %v1209, 0.01
        %v1297 = vmul.f32 %v1211, 0.01
        %v1298 = vmul.f32 %v1286, 0.01
        %v1299 = vmul.f32 %v1288, 0.01
        %v1300 = vmul.f32 %v1215, 0.01
        %v1301 = vmul.f32 %v1217, 0.01
        %v1302 = vmul.f32 %v1292, 0.01
        %v1303 = vmul.f32 %v1294, 0.01
        %v1304 = vmax.f32 %v1209, %v1296
        %v1305 = vmax.f32 %v1211, %v1297
        %v1306 = vmax.f32 %v1286, %v1298
        %v1307 = vmax.f32 %v1288, %v1299
        %v1308 = vmax.f32 %v1215, %v1300
        %v1309 = vmax.f32 %v1217, %v1301
        %v1310 = vmax.f32 %v1292, %v1302
        %v1311 = vmax.f32 %v1294, %v1303
        %v1312 = vmul.f32 %v1304, %v1114
        %v1313 = vmul.f32 %v1305, %v1115
        %v1314 = vmul.f32 %v1306, %v1116
        %v1315 = vmul.f32 %v1307, %v1117
        %v1316 = vmul.f32 %v1308, %v1118
        %v1317 = vmul.f32 %v1309, %v1119
        %v1318 = vmul.f32 %v1310, %v1120
        %v1319 = vmul.f32 %v1311, %v1121
        %v1320 = vadd.f32 %v1114, %v1312
        %v1321 = vadd.f32 %v1115, %v1313
        %v1322 = vadd.f32 %v1116, %v1314
        %v1323 = vadd.f32 %v1117, %v1315
        %v1324 = vadd.f32 %v1118, %v1316
        %v1325 = vadd.f32 %v1119, %v1317
        %v1326 = vadd.f32 %v1120, %v1318
        %v1327 = vadd.f32 %v1121, %v1319
        %v1328 = vld [vmem:[%s7] sm:$0xff]
        %v1329 = vld [vmem:[%s7 + $0x8] sm:$0xff]
        %v1330 = vld [vmem:[%s8] sm:$0xff]
        %v1331 = vld [vmem:[%s8 + $0x8] sm:$0xff]
        %1333 = vset.pattern.permute.xlu0 0
        %1334 = vperm.xlu0 %1333, %v1330
        %v1335 = vpop.permute.xlu0 %1334
        %1338 = vset.pattern.permute.xlu0 0
        %1339 = vperm.xlu0 %1338, %v1331
        %v1340 = vpop.permute.xlu0 %1339
        %v1343 = vsel %vm929, %v1328, 0
        %v1346 = vsel %vm929, %v1329, 0
        %1348 = vmatprep.subr.mxu0 %v1321
        %1349 = vmatpush1.msra.mxu0 %v1320
        %1350 = vmatprep.subr.mxu0 %v1325
        %1351 = vmatpush1.msra.mxu0 %v1324
        %1352 = vmatprep.subr.mxu0 0.0
        %1353 = vmatpush1.msra.mxu0 0.0
        %1354 = vmatprep.subr.mxu0 0.0
        %1355 = vmatpush1.msra.mxu0 0.0
        %1356 = vmatprep.subr.mxu0 0.0
        %1357 = vmatpush1.msra.mxu0 0.0
        %1358 = vmatprep.subr.mxu0 0.0
        %1359 = vmatpush1.msra.mxu0 0.0
        %1360 = vmatprep.subr.mxu0 0.0
        %1361 = vmatpush1.msra.mxu0 0.0
        %1362 = vmatprep.subr.mxu0 0.0
        %1363 = vmatpush1.msra.mxu0 0.0
        %1364 = vmatprep.subr.mxu0 0.0
        %1365 = vmatpush1.msra.mxu0 0.0
        %1366 = vmatprep.subr.mxu0 0.0
        %1367 = vmatpush1.msra.mxu0 0.0
        %1368 = vmatprep.subr.mxu0 0.0
        %1369 = vmatpush1.msra.mxu0 0.0
        %1370 = vmatprep.subr.mxu0 0.0
        %1371 = vmatpush1.msra.mxu0 0.0
        %1372 = vmatprep.subr.mxu0 0.0
        %1373 = vmatpush1.msra.mxu0 0.0
        %1374 = vmatprep.subr.mxu0 0.0
        %1375 = vmatpush1.msra.mxu0 0.0
        %1376 = vmatprep.subr.mxu0 0.0
        %1377 = vmatpush1.msra.mxu0 0.0
        %1378 = vmatprep.subr.mxu0 0.0
        %1379 = vmatpush1.msra.mxu0 0.0
        %1380 = vmatprep.subr.mxu0 0.0
        %1381 = vmatpush1.msra.mxu0 0.0
        %1382 = vmatprep.subr.mxu0 0.0
        %1383 = vmatpush1.msra.mxu0 0.0
        %1384 = vmatprep.subr.mxu0 0.0
        %1385 = vmatpush1.msra.mxu0 0.0
        %1386 = vmatprep.subr.mxu0 0.0
        %1387 = vmatpush1.msra.mxu0 0.0
        %1388 = vmatprep.subr.mxu0 0.0
        %1389 = vmatpush1.msra.mxu0 0.0
        %1390 = vmatprep.subr.mxu0 0.0
        %1391 = vmatpush1.msra.mxu0 0.0
        %1392 = vmatprep.subr.mxu0 0.0
        %1393 = vmatpush1.msra.mxu0 0.0
        %1394 = vmatprep.subr.mxu0 0.0
        %1395 = vmatpush1.msra.mxu0 0.0
        %1396 = vmatprep.subr.mxu0 0.0
        %1397 = vmatpush1.msra.mxu0 0.0
        %1398 = vmatprep.subr.mxu0 0.0
        %1399 = vmatpush1.msra.mxu0 0.0
        %1400 = vmatprep.subr.mxu0 0.0
        %1401 = vmatpush1.msra.mxu0 0.0
        %1402 = vmatprep.subr.mxu0 0.0
        %1403 = vmatpush1.msra.mxu0 0.0
        %1404 = vmatprep.subr.mxu0 0.0
        %1405 = vmatpush1.msra.mxu0 0.0
        %1406 = vmatprep.subr.mxu0 0.0
        %1407 = vmatpush1.msra.mxu0 0.0
        %1408 = vmatprep.subr.mxu0 0.0
        %1409 = vmatpush1.msra.mxu0 0.0
        %1410 = vmatprep.subr.mxu0 0.0
        %1411 = vmatpush1.msra.mxu0 0.0
        %1412 = vmatprep.mubr.f32.mxu0 0.0
        %1413 = vmatmul.mubr.f32.gmra.mrb[0].mxu0 %v1343
        %v1414 = vpop.f32.mrb[0].mxu0
        %v1415 = vadd.f32 %v1335, %v1414
        %v1416 = vpop.f32.mrb[0].mxu0
        %v1417 = vadd.f32 %v1335, %v1416
        %1418 = vmatprep.mubr.f32.mxu0 0.0
        %1419 = vmatmul.mubr.f32.gmra.mrb[0].mxu0 %v1346
        %v1420 = vpop.f32.mrb[0].mxu0
        %v1421 = vadd.f32 %v1340, %v1420
        %v1422 = vpop.f32.mrb[0].mxu0
        %v1423 = vadd.f32 %v1340, %v1422
        %1424 = vdwg.mxu0
        %1425 = vmatprep.subr.mxu0 %v1323
        %1426 = vmatpush1.msra.mxu0 %v1322
        %1427 = vmatprep.subr.mxu0 %v1327
        %1428 = vmatpush1.msra.mxu0 %v1326
        %1429 = vmatprep.subr.mxu0 0.0
        %1430 = vmatpush1.msra.mxu0 0.0
        %1431 = vmatprep.subr.mxu0 0.0
        %1432 = vmatpush1.msra.mxu0 0.0
        %1433 = vmatprep.subr.mxu0 0.0
        %1434 = vmatpush1.msra.mxu0 0.0
        %1435 = vmatprep.subr.mxu0 0.0
        %1436 = vmatpush1.msra.mxu0 0.0
        %1437 = vmatprep.subr.mxu0 0.0
        %1438 = vmatpush1.msra.mxu0 0.0
        %1439 = vmatprep.subr.mxu0 0.0
        %1440 = vmatpush1.msra.mxu0 0.0
        %1441 = vmatprep.subr.mxu0 0.0
        %1442 = vmatpush1.msra.mxu0 0.0
        %1443 = vmatprep.subr.mxu0 0.0
        %1444 = vmatpush1.msra.mxu0 0.0
        %1445 = vmatprep.subr.mxu0 0.0
        %1446 = vmatpush1.msra.mxu0 0.0
        %1447 = vmatprep.subr.mxu0 0.0
        %1448 = vmatpush1.msra.mxu0 0.0
        %1449 = vmatprep.subr.mxu0 0.0
        %1450 = vmatpush1.msra.mxu0 0.0
        %1451 = vmatprep.subr.mxu0 0.0
        %1452 = vmatpush1.msra.mxu0 0.0
        %1453 = vmatprep.subr.mxu0 0.0
        %1454 = vmatpush1.msra.mxu0 0.0
        %1455 = vmatprep.subr.mxu0 0.0
        %1456 = vmatpush1.msra.mxu0 0.0
        %1457 = vmatprep.subr.mxu0 0.0
        %1458 = vmatpush1.msra.mxu0 0.0
        %1459 = vmatprep.subr.mxu0 0.0
        %1460 = vmatpush1.msra.mxu0 0.0
        %1461 = vmatprep.subr.mxu0 0.0
        %1462 = vmatpush1.msra.mxu0 0.0
        %1463 = vmatprep.subr.mxu0 0.0
        %1464 = vmatpush1.msra.mxu0 0.0
        %1465 = vmatprep.subr.mxu0 0.0
        %1466 = vmatpush1.msra.mxu0 0.0
        %1467 = vmatprep.subr.mxu0 0.0
        %1468 = vmatpush1.msra.mxu0 0.0
        %1469 = vmatprep.subr.mxu0 0.0
        %1470 = vmatpush1.msra.mxu0 0.0
        %1471 = vmatprep.subr.mxu0 0.0
        %1472 = vmatpush1.msra.mxu0 0.0
        %1473 = vmatprep.subr.mxu0 0.0
        %1474 = vmatpush1.msra.mxu0 0.0
        %1475 = vmatprep.subr.mxu0 0.0
        %1476 = vmatpush1.msra.mxu0 0.0
        %1477 = vmatprep.subr.mxu0 0.0
        %1478 = vmatpush1.msra.mxu0 0.0
        %1479 = vmatprep.subr.mxu0 0.0
        %1480 = vmatpush1.msra.mxu0 0.0
        %1481 = vmatprep.subr.mxu0 0.0
        %1482 = vmatpush1.msra.mxu0 0.0
        %1483 = vmatprep.subr.mxu0 0.0
        %1484 = vmatpush1.msra.mxu0 0.0
        %1485 = vmatprep.subr.mxu0 0.0
        %1486 = vmatpush1.msra.mxu0 0.0
        %1487 = vmatprep.subr.mxu0 0.0
        %1488 = vmatpush1.msra.mxu0 0.0
        %1489 = vmatprep.mubr.f32.mxu0 0.0
        %1490 = vmatmul.mubr.f32.gmra.mrb[0].mxu0 %v1343
        %v1491 = vpop.f32.mrb[0].mxu0
        %v1492 = vadd.f32 %v1335, %v1491
        %v1493 = vpop.f32.mrb[0].mxu0
        %v1494 = vadd.f32 %v1335, %v1493
        %1495 = vmatprep.mubr.f32.mxu0 0.0
        %1496 = vmatmul.mubr.f32.gmra.mrb[0].mxu0 %v1346
        %v1497 = vpop.f32.mrb[0].mxu0
        %v1498 = vadd.f32 %v1340, %v1497
        %v1499 = vpop.f32.mrb[0].mxu0
        %v1500 = vadd.f32 %v1340, %v1499
        %1501 = vdwg.mxu0
        %v1502 = vmul.f32 %v1415, 0.01
        %v1503 = vmul.f32 %v1417, 0.01
        %v1504 = vmul.f32 %v1492, 0.01
        %v1505 = vmul.f32 %v1494, 0.01
        %v1506 = vmul.f32 %v1421, 0.01
        %v1507 = vmul.f32 %v1423, 0.01
        %v1508 = vmul.f32 %v1498, 0.01
        %v1509 = vmul.f32 %v1500, 0.01
        %v1510 = vmax.f32 %v1415, %v1502
        %v1511 = vmax.f32 %v1417, %v1503
        %v1512 = vmax.f32 %v1492, %v1504
        %v1513 = vmax.f32 %v1494, %v1505
        %v1514 = vmax.f32 %v1421, %v1506
        %v1515 = vmax.f32 %v1423, %v1507
        %v1516 = vmax.f32 %v1498, %v1508
        %v1517 = vmax.f32 %v1500, %v1509
        %v1518 = vld [vmem:[%s9] sm:$0xff]
        %v1519 = vld [vmem:[%s9 + $0x8] sm:$0xff]
        %v1520 = vld [vmem:[%s10] sm:$0xff]
        %v1521 = vld [vmem:[%s10 + $0x8] sm:$0xff]
        %1523 = vset.pattern.permute.xlu0 0
        %1524 = vperm.xlu0 %1523, %v1520
        %v1525 = vpop.permute.xlu0 %1524
        %1528 = vset.pattern.permute.xlu0 0
        %1529 = vperm.xlu0 %1528, %v1521
        %v1530 = vpop.permute.xlu0 %1529
        %v1533 = vsel %vm929, %v1518, 0
        %v1536 = vsel %vm929, %v1519, 0
        %1538 = vmatprep.subr.mxu0 %v1511
        %1539 = vmatpush1.msra.mxu0 %v1510
        %1540 = vmatprep.subr.mxu0 %v1515
        %1541 = vmatpush1.msra.mxu0 %v1514
        %1542 = vmatprep.subr.mxu0 0.0
        %1543 = vmatpush1.msra.mxu0 0.0
        %1544 = vmatprep.subr.mxu0 0.0
        %1545 = vmatpush1.msra.mxu0 0.0
        %1546 = vmatprep.subr.mxu0 0.0
        %1547 = vmatpush1.msra.mxu0 0.0
        %1548 = vmatprep.subr.mxu0 0.0
        %1549 = vmatpush1.msra.mxu0 0.0
        %1550 = vmatprep.subr.mxu0 0.0
        %1551 = vmatpush1.msra.mxu0 0.0
        %1552 = vmatprep.subr.mxu0 0.0
        %1553 = vmatpush1.msra.mxu0 0.0
        %1554 = vmatprep.subr.mxu0 0.0
        %1555 = vmatpush1.msra.mxu0 0.0
        %1556 = vmatprep.subr.mxu0 0.0
        %1557 = vmatpush1.msra.mxu0 0.0
        %1558 = vmatprep.subr.mxu0 0.0
        %1559 = vmatpush1.msra.mxu0 0.0
        %1560 = vmatprep.subr.mxu0 0.0
        %1561 = vmatpush1.msra.mxu0 0.0
        %1562 = vmatprep.subr.mxu0 0.0
        %1563 = vmatpush1.msra.mxu0 0.0
        %1564 = vmatprep.subr.mxu0 0.0
        %1565 = vmatpush1.msra.mxu0 0.0
        %1566 = vmatprep.subr.mxu0 0.0
        %1567 = vmatpush1.msra.mxu0 0.0
        %1568 = vmatprep.subr.mxu0 0.0
        %1569 = vmatpush1.msra.mxu0 0.0
        %1570 = vmatprep.subr.mxu0 0.0
        %1571 = vmatpush1.msra.mxu0 0.0
        %1572 = vmatprep.subr.mxu0 0.0
        %1573 = vmatpush1.msra.mxu0 0.0
        %1574 = vmatprep.subr.mxu0 0.0
        %1575 = vmatpush1.msra.mxu0 0.0
        %1576 = vmatprep.subr.mxu0 0.0
        %1577 = vmatpush1.msra.mxu0 0.0
        %1578 = vmatprep.subr.mxu0 0.0
        %1579 = vmatpush1.msra.mxu0 0.0
        %1580 = vmatprep.subr.mxu0 0.0
        %1581 = vmatpush1.msra.mxu0 0.0
        %1582 = vmatprep.subr.mxu0 0.0
        %1583 = vmatpush1.msra.mxu0 0.0
        %1584 = vmatprep.subr.mxu0 0.0
        %1585 = vmatpush1.msra.mxu0 0.0
        %1586 = vmatprep.subr.mxu0 0.0
        %1587 = vmatpush1.msra.mxu0 0.0
        %1588 = vmatprep.subr.mxu0 0.0
        %1589 = vmatpush1.msra.mxu0 0.0
        %1590 = vmatprep.subr.mxu0 0.0
        %1591 = vmatpush1.msra.mxu0 0.0
        %1592 = vmatprep.subr.mxu0 0.0
        %1593 = vmatpush1.msra.mxu0 0.0
        %1594 = vmatprep.subr.mxu0 0.0
        %1595 = vmatpush1.msra.mxu0 0.0
        %1596 = vmatprep.subr.mxu0 0.0
        %1597 = vmatpush1.msra.mxu0 0.0
        %1598 = vmatprep.subr.mxu0 0.0
        %1599 = vmatpush1.msra.mxu0 0.0
        %1600 = vmatprep.subr.mxu0 0.0
        %1601 = vmatpush1.msra.mxu0 0.0
        %1602 = vmatprep.mubr.f32.mxu0 0.0
        %1603 = vmatmul.mubr.f32.gmra.mrb[0].mxu0 %v1533
        %v1604 = vpop.f32.mrb[0].mxu0
        %v1605 = vadd.f32 %v1525, %v1604
        %v1606 = vpop.f32.mrb[0].mxu0
        %v1607 = vadd.f32 %v1525, %v1606
        %1608 = vmatprep.mubr.f32.mxu0 0.0
        %1609 = vmatmul.mubr.f32.gmra.mrb[0].mxu0 %v1536
        %v1610 = vpop.f32.mrb[0].mxu0
        %v1611 = vadd.f32 %v1530, %v1610
        %v1612 = vpop.f32.mrb[0].mxu0
        %v1613 = vadd.f32 %v1530, %v1612
        %1614 = vdwg.mxu0
        %1615 = vmatprep.subr.mxu0 %v1513
        %1616 = vmatpush1.msra.mxu0 %v1512
        %1617 = vmatprep.subr.mxu0 %v1517
        %1618 = vmatpush1.msra.mxu0 %v1516
        %1619 = vmatprep.subr.mxu0 0.0
        %1620 = vmatpush1.msra.mxu0 0.0
        %1621 = vmatprep.subr.mxu0 0.0
        %1622 = vmatpush1.msra.mxu0 0.0
        %1623 = vmatprep.subr.mxu0 0.0
        %1624 = vmatpush1.msra.mxu0 0.0
        %1625 = vmatprep.subr.mxu0 0.0
        %1626 = vmatpush1.msra.mxu0 0.0
        %1627 = vmatprep.subr.mxu0 0.0
        %1628 = vmatpush1.msra.mxu0 0.0
        %1629 = vmatprep.subr.mxu0 0.0
        %1630 = vmatpush1.msra.mxu0 0.0
        %1631 = vmatprep.subr.mxu0 0.0
        %1632 = vmatpush1.msra.mxu0 0.0
        %1633 = vmatprep.subr.mxu0 0.0
        %1634 = vmatpush1.msra.mxu0 0.0
        %1635 = vmatprep.subr.mxu0 0.0
        %1636 = vmatpush1.msra.mxu0 0.0
        %1637 = vmatprep.subr.mxu0 0.0
        %1638 = vmatpush1.msra.mxu0 0.0
        %1639 = vmatprep.subr.mxu0 0.0
        %1640 = vmatpush1.msra.mxu0 0.0
        %1641 = vmatprep.subr.mxu0 0.0
        %1642 = vmatpush1.msra.mxu0 0.0
        %1643 = vmatprep.subr.mxu0 0.0
        %1644 = vmatpush1.msra.mxu0 0.0
        %1645 = vmatprep.subr.mxu0 0.0
        %1646 = vmatpush1.msra.mxu0 0.0
        %1647 = vmatprep.subr.mxu0 0.0
        %1648 = vmatpush1.msra.mxu0 0.0
        %1649 = vmatprep.subr.mxu0 0.0
        %1650 = vmatpush1.msra.mxu0 0.0
        %1651 = vmatprep.subr.mxu0 0.0
        %1652 = vmatpush1.msra.mxu0 0.0
        %1653 = vmatprep.subr.mxu0 0.0
        %1654 = vmatpush1.msra.mxu0 0.0
        %1655 = vmatprep.subr.mxu0 0.0
        %1656 = vmatpush1.msra.mxu0 0.0
        %1657 = vmatprep.subr.mxu0 0.0
        %1658 = vmatpush1.msra.mxu0 0.0
        %1659 = vmatprep.subr.mxu0 0.0
        %1660 = vmatpush1.msra.mxu0 0.0
        %1661 = vmatprep.subr.mxu0 0.0
        %1662 = vmatpush1.msra.mxu0 0.0
        %1663 = vmatprep.subr.mxu0 0.0
        %1664 = vmatpush1.msra.mxu0 0.0
        %1665 = vmatprep.subr.mxu0 0.0
        %1666 = vmatpush1.msra.mxu0 0.0
        %1667 = vmatprep.subr.mxu0 0.0
        %1668 = vmatpush1.msra.mxu0 0.0
        %1669 = vmatprep.subr.mxu0 0.0
        %1670 = vmatpush1.msra.mxu0 0.0
        %1671 = vmatprep.subr.mxu0 0.0
        %1672 = vmatpush1.msra.mxu0 0.0
        %1673 = vmatprep.subr.mxu0 0.0
        %1674 = vmatpush1.msra.mxu0 0.0
        %1675 = vmatprep.subr.mxu0 0.0
        %1676 = vmatpush1.msra.mxu0 0.0
        %1677 = vmatprep.subr.mxu0 0.0
        %1678 = vmatpush1.msra.mxu0 0.0
        %1679 = vmatprep.mubr.f32.mxu0 0.0
        %1680 = vmatmul.mubr.f32.gmra.mrb[0].mxu0 %v1533
        %v1681 = vpop.f32.mrb[0].mxu0
        %v1682 = vadd.f32 %v1525, %v1681
        %v1683 = vpop.f32.mrb[0].mxu0
        %v1684 = vadd.f32 %v1525, %v1683
        %1685 = vmatprep.mubr.f32.mxu0 0.0
        %1686 = vmatmul.mubr.f32.gmra.mrb[0].mxu0 %v1536
        %v1687 = vpop.f32.mrb[0].mxu0
        %v1688 = vadd.f32 %v1530, %v1687
        %v1689 = vpop.f32.mrb[0].mxu0
        %v1690 = vadd.f32 %v1530, %v1689
        %1691 = vdwg.mxu0
        %v1692 = vmul.f32 %v1605, 0.01
        %v1693 = vmul.f32 %v1607, 0.01
        %v1694 = vmul.f32 %v1682, 0.01
        %v1695 = vmul.f32 %v1684, 0.01
        %v1696 = vmul.f32 %v1611, 0.01
        %v1697 = vmul.f32 %v1613, 0.01
        %v1698 = vmul.f32 %v1688, 0.01
        %v1699 = vmul.f32 %v1690, 0.01
        %v1700 = vmax.f32 %v1605, %v1692
        %v1701 = vmax.f32 %v1607, %v1693
        %v1702 = vmax.f32 %v1682, %v1694
        %v1703 = vmax.f32 %v1684, %v1695
        %v1704 = vmax.f32 %v1611, %v1696
        %v1705 = vmax.f32 %v1613, %v1697
        %v1706 = vmax.f32 %v1688, %v1698
        %v1707 = vmax.f32 %v1690, %v1699
        %v1708 = vld [vmem:[%s11] sm:$0xff]
        %v1709 = vld [vmem:[%s11 + $0x8] sm:$0xff]
        %1711 = vset.pattern.permute.xlu0 0
        %1712 = vperm.xlu0 %1711, %v1708
        %v1713 = vpop.permute.xlu0 %1712
        %1716 = vset.pattern.permute.xlu0 0
        %1717 = vperm.xlu0 %1716, %v1709
        %v1718 = vpop.permute.xlu0 %1717
        %v1720 = vmul.f32 %v1700, %v1713
        %v1721 = vmul.f32 %v1701, %v1713
        %v1722 = vmul.f32 %v1702, %v1713
        %v1723 = vmul.f32 %v1703, %v1713
        %v1724 = vmul.f32 %v1704, %v1718
        %v1725 = vmul.f32 %v1705, %v1718
        %v1726 = vmul.f32 %v1706, %v1718
        %v1727 = vmul.f32 %v1707, %v1718
        %v1728 = vadd.f32 %v1720, %v1724
        %v1729 = vrot.slane %v1728, 4
        %v1730 = vadd.f32 %v1728, %v1729
        %v1731 = vrot.slane %v1730, 2
        %v1732 = vadd.f32 %v1730, %v1731
        %v1733 = vrot.slane %v1732, 1
        %v1734 = vadd.f32 %v1732, %v1733
        %v1735 = vadd.f32 %v1721, %v1725
        %v1736 = vrot.slane %v1735, 4
        %v1737 = vadd.f32 %v1735, %v1736
        %v1738 = vrot.slane %v1737, 2
        %v1739 = vadd.f32 %v1737, %v1738
        %v1740 = vrot.slane %v1739, 1
        %v1741 = vadd.f32 %v1739, %v1740
        %v1742 = vadd.f32 %v1722, %v1726
        %v1743 = vrot.slane %v1742, 4
        %v1744 = vadd.f32 %v1742, %v1743
        %v1745 = vrot.slane %v1744, 2
        %v1746 = vadd.f32 %v1744, %v1745
        %v1747 = vrot.slane %v1746, 1
        %v1748 = vadd.f32 %v1746, %v1747
        %v1749 = vadd.f32 %v1723, %v1727
        %v1750 = vrot.slane %v1749, 4
        %v1751 = vadd.f32 %v1749, %v1750
        %v1752 = vrot.slane %v1751, 2
        %v1753 = vadd.f32 %v1751, %v1752
        %v1754 = vrot.slane %v1753, 1
        %v1755 = vadd.f32 %v1753, %v1754
        %v1756 = vld [vmem:[#allocation2] sm:$0x1]
        %1758 = vset.pattern.permute.xlu0 0
        %1759 = vperm.xlu0 %1758, %v1756
        %v1760 = vpop.permute.xlu0 %1759
        %v1762 = vlaneseq
        %v1763 = vshrl.u32 %v1762, 7
        %v1764 = vsub.s32 0, %v1763
        %v1765 = vrot.slane %v1760, %v1764
        %v1766 = vadd.f32 %v1734, %v1765
        %v1767 = vadd.f32 %v1741, %v1765
        %v1768 = vadd.f32 %v1748, %v1765
        %v1769 = vadd.f32 %v1755, %v1765
        %v1774 = vcombine.low %v1766, %v1767
        %v1775 = vcombine.low %v1768, %v1769
        %v1777 = vunpack.c.l.s4 1966171168
        %v1778 = vunpack.c.0.s8 %v1777
        %v1779 = vlaneseq
        %v1780 = vshrl.u32 %v1779, 7
        %v1781 = vsub.s32 %v1778, %v1780
        %v1782 = vrot.slane %v1774, %v1781
        %v1784 = vunpack.c.l.s4 1966171168
        %v1785 = vunpack.c.0.s8 %v1784
        %v1786 = vlaneseq
        %v1787 = vshrl.u32 %v1786, 7
        %v1788 = vsub.s32 %v1785, %v1787
        %v1789 = vrot.slane %v1775, %v1788
        %v1790 = vcombine.low %v1782, %v1789
        %v1792 = vunpack.c.l.s4 1966171168
        %v1793 = vunpack.c.0.s8 %v1792
        %v1794 = vlaneseq
        %v1795 = vshrl.u32 %v1794, 7
        %v1796 = vsub.s32 %v1793, %v1795
        %v1797 = vrot.slane %v1790, %v1796
        %v1799 = vlaneseq
        %vm1800 = vcmp.ge.s32.totalorder %v1799, 0
        %vm1801 = vcmp.lt.s32.totalorder %v1799, 512
        %vm1802 = vmand %vm1800, %vm1801
        %1803 = vst.msk [vmem:[%s448] sm:$0xf] %vm1802, %v1797
        %s1804 = sand.u32 %s315, 1
        %s1805 = scalar_lea.sflag [#allocation4], %s1804
        %s1806 = sand.u32 %s315, 1
        %s1807 = smul.addr %s1806, 4
        %s1808 = scalar_lea.vmem [#allocation3], %s1807
        // Predicated region
        $region73: #{mnn_forward.1} parent=71 // pred_check
          %p1809 = pneg %p325
        $region74: #{mnn_forward.1} parent=71 // pred_check_branch
          %1811 = sbr.rel (%p1809) target = $region76
        $region75: #{mnn_forward.1} parent=71 // pred_region
          %s1812 = smul.u32 4, %s29
          %s1813 = ssub.s32 5, %s1812
          %p1814 = scmp.lt.s32.totalorder %s1813, 4
          %s1815 = scalar_select %p1814, %s1813, 4
          %s1816 = smul.u32 16, %s1815
          %s1818 = ssub.s32 64, %s1816
          %1819 = vsyncadd %s1805, %s1818
          %p1820 = scmp.ne.s32.totalorder 0, %s1816
          %s1821 = smul.addr %s1812, 16
          %s1822 = scalar_lea.hbm %s13, %s1821
          %s1823 = sshll.u32 %s1815, 4
          %s1824 = sshll.u32 %s1808, 4
          %s1825 = int_to_ptr.vmem [resolvable:$true] %s1824
          %1827 = dma.vmem_to_hbm [thread:$0]  (%p1820), %s1825, %s1823, %s1822, %s1805
        $region76: #{mnn_forward.1} parent=71 // pred_fallthru
          _
      $region72: #{mnn_forward.1} parent=5 // pred_fallthru
        _
      %p1828 = scmp.le.s32.totalorder 2, %s24
      // Predicated region
      $region77: #{mnn_forward.1} parent=5 // pred_check
        %p1829 = pneg %p1828
      $region78: #{mnn_forward.1} parent=5 // pred_check_branch
        %1831 = sbr.rel (%p1829) target = $region80
      $region79: #{mnn_forward.1} parent=5 // pred_region
        %s1832 = ssub.s32 %s24, 2
        // Predicated region
        $region81: #{mnn_forward.1} parent=79 // pred_check
          %p1833 = pneg %p331
        $region82: #{mnn_forward.1} parent=79 // pred_check_branch
          %1835 = sbr.rel (%p1833) target = $region84
        $region83: #{mnn_forward.1} parent=79 // pred_region
          %s1836 = sand.u32 %s316, 1
          %s1837 = scalar_lea.sflag [#allocation4], %s1836
          %s1838 = sand.u32 %s316, 1
          %s1839 = smul.addr %s1838, 4
          %s1840 = scalar_lea.vmem [#allocation3], %s1839
          %1841 = dma.done %s1837, 64
        $region84: #{mnn_forward.1} parent=79 // pred_fallthru
          _
      $region80: #{mnn_forward.1} parent=5 // pred_fallthru
        _
    $region6: #{mnn_forward.1} parent=1 // loop_footer
      %s28 = sadd.s32 1, %s24
    $region7: #{mnn_forward.1} parent=1 // loop_footer_branch
      %23 = sbr.rel target = $region3
    $region8: #{mnn_forward.1} parent=1 // loop_exit
      _
    %1842 = vsyncpa [#allocation4], 1
    %s1843 = scalar_lea.sflag [#allocation4], 1
    %1844 = vsyncpa %s1843, 1

</llo_original>
